<compile_context>
chip_gen: v7x
topology: tpu7x:2x2x1
jax: 0.10.0
libtpu: 0.0.40
codegen_flags: <defaults>
</compile_context>

<pallas_src>
import jax
import jax.numpy as jnp
from jax.experimental import pallas as pl
from jax.experimental.pallas import tpu as pltpu

# ----------------------------- model hyperparameters -----------------------------
BS = 64          # per-problem batch size (the BatchNorm batch)
XDIM = 2         # input feature dim
HDIM = 2         # hidden dim
N_HIDDEN = 2     # number of extra hidden blocks
N_CLASSES = 3    # mixture components
BN_EPS = 1e-5


def _build_kernel(layer_dims, out_dims, temperature, batch_size):
    """Kernel for (Linear -> ReLU -> BatchNorm1d) x len(layer_dims) + Linear + softmax.

    layer_dims: list of (din, dout) for the BN blocks.
    out_dims:   (din, n_classes) for the final Linear.

    Packed parameter layout (flat f32 vector in SMEM), per BN block:
        W (din*dout, row-major: W[k, j] at k*dout + j), b (dout), gamma (dout), beta (dout)
    followed by:
        W_out (din*n_classes, row-major), b_out (n_classes)
    """
    inv_bs = 1.0 / float(batch_size)
    apply_temp = abs(float(temperature) - 1.0) > 1e-12
    inv_t = 1.0 / float(temperature)
    xdim = layer_dims[0][0]

    def kernel(x_ref, p_ref, o_ref):
        # x_ref: (xdim, BS, P)       f32 VMEM  (features unrolled, batch on sublanes,
        #                                       problems on lanes -> lane-dense)
        # p_ref: (n_params,)         f32 SMEM  (all weights / biases / BN params, scalars)
        # o_ref: (n_classes, BS, P)  f32 VMEM
        x = x_ref[...]                          # single load of the whole input tile
        h = [x[k] for k in range(xdim)]         # list of (BS, P) slabs (slices of the loaded value)

        def linear(rows, din, dout, base):
            # rows: `din` slabs of (BS, P). Returns `dout` slabs of (h @ W + b) built from
            # scalar-broadcast FMAs on the VPU (2x2 / 2x3 shapes do not warrant the MXU).
            outs = []
            for j in range(dout):
                acc = rows[0] * p_ref[base + j] + p_ref[base + din * dout + j]   # W[0,j], bias
                for k in range(1, din):
                    acc = acc + rows[k] * p_ref[base + k * dout + j]
                outs.append(acc)
            return outs

        idx = 0
        for (din, dout) in layer_dims:
            lin = linear(h, din, dout, idx)
            idx += din * dout + dout
            g_base, b_base = idx, idx + dout                    # gamma, beta
            idx += 2 * dout
            new_h = []
            for j in range(dout):
                a = jnp.maximum(lin[j], 0.0)                    # ReLU
                # One-pass per-problem batch statistics (biased variance, BN training mode).
                # axis=0 is the 64-sample batch on sublanes: each reduce covers all P problems.
                s1 = jnp.sum(a, axis=0, keepdims=True)          # (1, P)
                s2 = jnp.sum(a * a, axis=0, keepdims=True)      # (1, P)
                m = s1 * inv_bs
                var = jnp.maximum(s2 * inv_bs - m * m, 0.0)     # clamp rounding negatives
                scale = p_ref[g_base + j] * jax.lax.rsqrt(var + BN_EPS)   # rsqrt -> EUP slot
                shift = p_ref[b_base + j] - m * scale
                new_h.append(a * scale + shift)                 # single FMA per element
            h = new_h

        din, ncls = out_dims
        logits = linear(h, din, ncls, idx)                      # list of (BS, P) slabs

        if apply_temp:                                          # elided at build time when T == 1
            logits = [l * inv_t for l in logits]

        # softmax over classes (class slabs are separate arrays; per-(sample, problem) normalize)
        mx = logits[0]
        for l in logits[1:]:
            mx = jnp.maximum(mx, l)
        es = [jnp.exp(l - mx) for l in logits]
        denom = es[0]
        for e in es[1:]:
            denom = denom + e
        inv_denom = 1.0 / denom                                 # exact (meets 2e-5 tolerance)
        for j in range(ncls):
            o_ref[j] = es[j] * inv_denom                        # (BS, P) lane-dense, unmasked store

    return kernel


def pack_params(params):
    """Pack all parameter tensors into ONE flat f32 vector. Call once, not per forward."""
    return jnp.concatenate([jnp.asarray(p, jnp.float32).reshape(-1) for p in params])


def build_forward(layer_dims, out_dims, *, T=1.0, bs=BS, block_problems=128):
    """Build fwd(x_fm, packed) -> probs_fm.

    x_fm:    (xdim, bs, n_problems)       feature-major, problems on the last (lane) axis
    packed:  flat f32 parameter vector from pack_params()
    returns: (n_classes, bs, n_problems)  softmax(encoder(x) / T, dim=1), per problem.

    Each "problem" is one independent module.forward(x, T) call; BatchNorm statistics are
    computed per problem over its own `bs` samples (training-mode semantics).
    """
    xdim = layer_dims[0][0]
    n_classes = out_dims[1]
    P = block_problems          # problems per grid step = lanes per slab (>=128 => lane-dense)
    kernel = _build_kernel(layer_dims, out_dims, float(T), bs)

    def forward_fm(x_fm, packed):
        n_problems = x_fm.shape[-1]
        pad = (-n_problems) % P
        if pad:     # zero-pad to whole lane-dense blocks; padded problems are numerically safe
            x_fm = jnp.pad(x_fm, ((0, 0), (0, 0), (0, pad)))
        total = x_fm.shape[-1]
        out = pl.pallas_call(
            kernel,
            out_shape=jax.ShapeDtypeStruct((n_classes, bs, total), jnp.float32),
            grid_spec=pltpu.PrefetchScalarGridSpec(
                num_scalar_prefetch=0,
                grid=(total // P,),
                in_specs=[
                    pl.BlockSpec((xdim, bs, P), lambda i: (0, 0, i)),      # x slab per step
                    pl.BlockSpec(memory_space=pltpu.MemorySpace.SMEM),     # packed params (whole)
                ],
                out_specs=pl.BlockSpec((n_classes, bs, P), lambda i: (0, 0, i)),
            ),
            compiler_params=pltpu.CompilerParams(
                dimension_semantics=("parallel",)),   # shard problems across v7x's 2 TCs
        )(x_fm, packed)
        if pad:
            out = out[..., :n_problems]
        return out

    return forward_fm


def init_params(key, xdim, hdim, n_hidden, n_classes):
    """Deterministic synthetic parameter init (same shapes as the PyTorch module)."""
    params = []
    dims = [(xdim, hdim)] + [(hdim, hdim)] * n_hidden
    for din, dout in dims:
        key, kw, kb = jax.random.split(key, 3)
        w = jax.random.normal(kw, (din, dout), jnp.float32) * 0.5
        b = jax.random.normal(kb, (1, dout), jnp.float32) * 0.1
        gamma = jnp.ones((1, dout), jnp.float32)
        beta = jnp.zeros((1, dout), jnp.float32)
        params += [w, b, gamma, beta]
    key, kw, kb = jax.random.split(key, 3)
    w_out = jax.random.normal(kw, (hdim, n_classes), jnp.float32) * 0.5
    b_out = jax.random.normal(kb, (1, n_classes), jnp.float32) * 0.1
    params += [w_out, b_out]
    return params


def reference_forward(x, params, T=1.0):
    """Plain-JAX reference (PyTorch training-mode semantics) for one problem."""
    n_bn_blocks = (len(params) - 2) // 4
    h = x.astype(jnp.float32)
    idx = 0
    for _ in range(n_bn_blocks):
        w, b, g, bt = params[idx], params[idx + 1], params[idx + 2], params[idx + 3]
        idx += 4
        h = jnp.maximum(h @ w + b, 0.0)
        mean = jnp.mean(h, axis=0, keepdims=True)
        var = jnp.mean((h - mean) ** 2, axis=0, keepdims=True)      # biased
        h = (h - mean) / jnp.sqrt(var + BN_EPS) * g + bt
    logits = h @ params[idx] + params[idx + 1]
    return jax.nn.softmax(logits / T, axis=1)


if __name__ == "__main__":
    key = jax.random.PRNGKey(0)
    key, kx = jax.random.split(key)

    # 256 independent forward evaluations, each on a (BS, XDIM) mini-batch (as during fit()).
    NP = 256
    x = jax.random.normal(kx, (NP, BS, XDIM), jnp.float32) * 3.0
    params = init_params(key, XDIM, HDIM, N_HIDDEN, N_CLASSES)

    layer_dims = [(XDIM, HDIM)] + [(HDIM, HDIM)] * N_HIDDEN
    out_dims = (HDIM, N_CLASSES)

    packed = pack_params(params)                 # packed ONCE, reused for every forward
    x_fm = jnp.transpose(x, (2, 1, 0))           # ONE transpose over the whole problem batch

    # T == 1 path (temperature multiply elided)
    fwd = jax.jit(build_forward(layer_dims, out_dims, T=1.0, bs=BS, block_problems=128))
    out_fm = jax.block_until_ready(fwd(x_fm, packed))        # (N_CLASSES, BS, NP)
    out = jnp.transpose(out_fm, (2, 1, 0))                   # (NP, BS, N_CLASSES)

    ref = jax.vmap(lambda xb: reference_forward(xb, params, T=1.0))(x)
    assert out.shape == (NP, BS, N_CLASSES)
    assert bool(jnp.allclose(out, ref, atol=2e-5, rtol=1e-4))
    assert bool(jnp.allclose(jnp.sum(out, axis=-1), 1.0, atol=1e-5))

    # T != 1 path (temperature multiply active)
    fwd_t = jax.jit(build_forward(layer_dims, out_dims, T=0.5, bs=BS, block_problems=128))
    out_t = jnp.transpose(jax.block_until_ready(fwd_t(x_fm, packed)), (2, 1, 0))
    ref_t = jax.vmap(lambda xb: reference_forward(xb, params, T=0.5))(x)
    assert bool(jnp.allclose(out_t, ref_t, atol=2e-5, rtol=1e-4))
    assert bool(jnp.allclose(jnp.sum(out_t, axis=-1), 1.0, atol=1e-5))

    print("KERNEL_OK")
</pallas_src>

<mosaic_0001>
module attributes {stable_mosaic.version = 11 : i64} {
  func.func @kernel(%arg0: i32, %arg1: memref<2x64x128xf32, #tpu.memory_space<vmem>>, %arg2: memref<39xf32, #tpu.memory_space<smem>>, %arg3: memref<3x64x128xf32, #tpu.memory_space<vmem>>) attributes {dimension_semantics = [#tpu.dimension_semantics<parallel>], iteration_bounds = array<i64: 2>, scalar_prefetch = 0 : i64, scratch_operands = 0 : i64, tpu.core_type = #tpu.core_type<tc>, window_params = [{transform_indices = @transform_0, window_bounds = array<i64: 2, 64, 128>}, {transform_indices = @transform_1, window_bounds = array<i64: 39>}, {transform_indices = @transform_2, window_bounds = array<i64: 3, 64, 128>}]} {
    %c0 = arith.constant 0 : index
    %c0_0 = arith.constant 0 : index
    %c0_1 = arith.constant 0 : index
    %0 = vector.load %arg1[%c0, %c0_0, %c0_1] : memref<2x64x128xf32, #tpu.memory_space<vmem>>, vector<2x64x128xf32>
    %1 = vector.extract_strided_slice %0 {offsets = [0, 0, 0], sizes = [1, 64, 128], strides = [1, 1, 1]} : vector<2x64x128xf32> to vector<1x64x128xf32>
    %2 = vector.shape_cast %1 : vector<1x64x128xf32> to vector<64x128xf32>
    %3 = vector.extract_strided_slice %0 {offsets = [1, 0, 0], sizes = [1, 64, 128], strides = [1, 1, 1]} : vector<2x64x128xf32> to vector<1x64x128xf32>
    %4 = vector.shape_cast %3 : vector<1x64x128xf32> to vector<64x128xf32>
    %c0_2 = arith.constant 0 : index
    %5 = memref.load %arg2[%c0_2] : memref<39xf32, #tpu.memory_space<smem>>
    %6 = vector.broadcast %5 : f32 to vector<64x128xf32>
    %7 = arith.mulf %2, %6 : vector<64x128xf32>
    %c4 = arith.constant 4 : index
    %8 = memref.load %arg2[%c4] : memref<39xf32, #tpu.memory_space<smem>>
    %9 = vector.broadcast %8 : f32 to vector<64x128xf32>
    %10 = arith.addf %7, %9 : vector<64x128xf32>
    %c2 = arith.constant 2 : index
    %11 = memref.load %arg2[%c2] : memref<39xf32, #tpu.memory_space<smem>>
    %12 = vector.broadcast %11 : f32 to vector<64x128xf32>
    %13 = arith.mulf %4, %12 : vector<64x128xf32>
    %14 = arith.addf %10, %13 : vector<64x128xf32>
    %c1 = arith.constant 1 : index
    %15 = memref.load %arg2[%c1] : memref<39xf32, #tpu.memory_space<smem>>
    %16 = vector.broadcast %15 : f32 to vector<64x128xf32>
    %17 = arith.mulf %2, %16 : vector<64x128xf32>
    %c5 = arith.constant 5 : index
    %18 = memref.load %arg2[%c5] : memref<39xf32, #tpu.memory_space<smem>>
    %19 = vector.broadcast %18 : f32 to vector<64x128xf32>
    %20 = arith.addf %17, %19 : vector<64x128xf32>
    %c3 = arith.constant 3 : index
    %21 = memref.load %arg2[%c3] : memref<39xf32, #tpu.memory_space<smem>>
    %22 = vector.broadcast %21 : f32 to vector<64x128xf32>
    %23 = arith.mulf %4, %22 : vector<64x128xf32>
    %24 = arith.addf %20, %23 : vector<64x128xf32>
    %cst = arith.constant 0.000000e+00 : f32
    %25 = vector.broadcast %cst : f32 to vector<64x128xf32>
    %26 = arith.maximumf %14, %25 : vector<64x128xf32>
    %cst_3 = arith.constant dense<0.000000e+00> : vector<128xf32>
    %27 = vector.multi_reduction <add>, %26, %cst_3 [0] : vector<64x128xf32> to vector<128xf32>
    %28 = vector.shape_cast %27 : vector<128xf32> to vector<1x128xf32>
    %29 = arith.mulf %26, %26 : vector<64x128xf32>
    %cst_4 = arith.constant dense<0.000000e+00> : vector<128xf32>
    %30 = vector.multi_reduction <add>, %29, %cst_4 [0] : vector<64x128xf32> to vector<128xf32>
    %31 = vector.shape_cast %30 : vector<128xf32> to vector<1x128xf32>
    %cst_5 = arith.constant 1.562500e-02 : f32
    %32 = vector.broadcast %cst_5 : f32 to vector<1x128xf32>
    %33 = arith.mulf %28, %32 : vector<1x128xf32>
    %cst_6 = arith.constant 1.562500e-02 : f32
    %34 = vector.broadcast %cst_6 : f32 to vector<1x128xf32>
    %35 = arith.mulf %31, %34 : vector<1x128xf32>
    %36 = arith.mulf %33, %33 : vector<1x128xf32>
    %37 = arith.subf %35, %36 : vector<1x128xf32>
    %cst_7 = arith.constant 0.000000e+00 : f32
    %38 = vector.broadcast %cst_7 : f32 to vector<1x128xf32>
    %39 = arith.maximumf %37, %38 : vector<1x128xf32>
    %c6 = arith.constant 6 : index
    %40 = memref.load %arg2[%c6] : memref<39xf32, #tpu.memory_space<smem>>
    %cst_8 = arith.constant 9.99999974E-6 : f32
    %41 = vector.broadcast %cst_8 : f32 to vector<1x128xf32>
    %42 = arith.addf %39, %41 : vector<1x128xf32>
    %43 = math.rsqrt %42 : vector<1x128xf32>
    %44 = vector.broadcast %40 : f32 to vector<1x128xf32>
    %45 = arith.mulf %44, %43 : vector<1x128xf32>
    %c8 = arith.constant 8 : index
    %46 = memref.load %arg2[%c8] : memref<39xf32, #tpu.memory_space<smem>>
    %47 = arith.mulf %33, %45 : vector<1x128xf32>
    %48 = vector.broadcast %46 : f32 to vector<1x128xf32>
    %49 = arith.subf %48, %47 : vector<1x128xf32>
    %50 = vector.broadcast %45 : vector<1x128xf32> to vector<64x128xf32>
    %51 = arith.mulf %26, %50 : vector<64x128xf32>
    %52 = vector.broadcast %49 : vector<1x128xf32> to vector<64x128xf32>
    %53 = arith.addf %51, %52 : vector<64x128xf32>
    %cst_9 = arith.constant 0.000000e+00 : f32
    %54 = vector.broadcast %cst_9 : f32 to vector<64x128xf32>
    %55 = arith.maximumf %24, %54 : vector<64x128xf32>
    %cst_10 = arith.constant dense<0.000000e+00> : vector<128xf32>
    %56 = vector.multi_reduction <add>, %55, %cst_10 [0] : vector<64x128xf32> to vector<128xf32>
    %57 = vector.shape_cast %56 : vector<128xf32> to vector<1x128xf32>
    %58 = arith.mulf %55, %55 : vector<64x128xf32>
    %cst_11 = arith.constant dense<0.000000e+00> : vector<128xf32>
    %59 = vector.multi_reduction <add>, %58, %cst_11 [0] : vector<64x128xf32> to vector<128xf32>
    %60 = vector.shape_cast %59 : vector<128xf32> to vector<1x128xf32>
    %cst_12 = arith.constant 1.562500e-02 : f32
    %61 = vector.broadcast %cst_12 : f32 to vector<1x128xf32>
    %62 = arith.mulf %57, %61 : vector<1x128xf32>
    %cst_13 = arith.constant 1.562500e-02 : f32
    %63 = vector.broadcast %cst_13 : f32 to vector<1x128xf32>
    %64 = arith.mulf %60, %63 : vector<1x128xf32>
    %65 = arith.mulf %62, %62 : vector<1x128xf32>
    %66 = arith.subf %64, %65 : vector<1x128xf32>
    %cst_14 = arith.constant 0.000000e+00 : f32
    %67 = vector.broadcast %cst_14 : f32 to vector<1x128xf32>
    %68 = arith.maximumf %66, %67 : vector<1x128xf32>
    %c7 = arith.constant 7 : index
    %69 = memref.load %arg2[%c7] : memref<39xf32, #tpu.memory_space<smem>>
    %cst_15 = arith.constant 9.99999974E-6 : f32
    %70 = vector.broadcast %cst_15 : f32 to vector<1x128xf32>
    %71 = arith.addf %68, %70 : vector<1x128xf32>
    %72 = math.rsqrt %71 : vector<1x128xf32>
    %73 = vector.broadcast %69 : f32 to vector<1x128xf32>
    %74 = arith.mulf %73, %72 : vector<1x128xf32>
    %c9 = arith.constant 9 : index
    %75 = memref.load %arg2[%c9] : memref<39xf32, #tpu.memory_space<smem>>
    %76 = arith.mulf %62, %74 : vector<1x128xf32>
    %77 = vector.broadcast %75 : f32 to vector<1x128xf32>
    %78 = arith.subf %77, %76 : vector<1x128xf32>
    %79 = vector.broadcast %74 : vector<1x128xf32> to vector<64x128xf32>
    %80 = arith.mulf %55, %79 : vector<64x128xf32>
    %81 = vector.broadcast %78 : vector<1x128xf32> to vector<64x128xf32>
    %82 = arith.addf %80, %81 : vector<64x128xf32>
    %c10 = arith.constant 10 : index
    %83 = memref.load %arg2[%c10] : memref<39xf32, #tpu.memory_space<smem>>
    %84 = vector.broadcast %83 : f32 to vector<64x128xf32>
    %85 = arith.mulf %53, %84 : vector<64x128xf32>
    %c14 = arith.constant 14 : index
    %86 = memref.load %arg2[%c14] : memref<39xf32, #tpu.memory_space<smem>>
    %87 = vector.broadcast %86 : f32 to vector<64x128xf32>
    %88 = arith.addf %85, %87 : vector<64x128xf32>
    %c12 = arith.constant 12 : index
    %89 = memref.load %arg2[%c12] : memref<39xf32, #tpu.memory_space<smem>>
    %90 = vector.broadcast %89 : f32 to vector<64x128xf32>
    %91 = arith.mulf %82, %90 : vector<64x128xf32>
    %92 = arith.addf %88, %91 : vector<64x128xf32>
    %c11 = arith.constant 11 : index
    %93 = memref.load %arg2[%c11] : memref<39xf32, #tpu.memory_space<smem>>
    %94 = vector.broadcast %93 : f32 to vector<64x128xf32>
    %95 = arith.mulf %53, %94 : vector<64x128xf32>
    %c15 = arith.constant 15 : index
    %96 = memref.load %arg2[%c15] : memref<39xf32, #tpu.memory_space<smem>>
    %97 = vector.broadcast %96 : f32 to vector<64x128xf32>
    %98 = arith.addf %95, %97 : vector<64x128xf32>
    %c13 = arith.constant 13 : index
    %99 = memref.load %arg2[%c13] : memref<39xf32, #tpu.memory_space<smem>>
    %100 = vector.broadcast %99 : f32 to vector<64x128xf32>
    %101 = arith.mulf %82, %100 : vector<64x128xf32>
    %102 = arith.addf %98, %101 : vector<64x128xf32>
    %cst_16 = arith.constant 0.000000e+00 : f32
    %103 = vector.broadcast %cst_16 : f32 to vector<64x128xf32>
    %104 = arith.maximumf %92, %103 : vector<64x128xf32>
    %cst_17 = arith.constant dense<0.000000e+00> : vector<128xf32>
    %105 = vector.multi_reduction <add>, %104, %cst_17 [0] : vector<64x128xf32> to vector<128xf32>
    %106 = vector.shape_cast %105 : vector<128xf32> to vector<1x128xf32>
    %107 = arith.mulf %104, %104 : vector<64x128xf32>
    %cst_18 = arith.constant dense<0.000000e+00> : vector<128xf32>
    %108 = vector.multi_reduction <add>, %107, %cst_18 [0] : vector<64x128xf32> to vector<128xf32>
    %109 = vector.shape_cast %108 : vector<128xf32> to vector<1x128xf32>
    %cst_19 = arith.constant 1.562500e-02 : f32
    %110 = vector.broadcast %cst_19 : f32 to vector<1x128xf32>
    %111 = arith.mulf %106, %110 : vector<1x128xf32>
    %cst_20 = arith.constant 1.562500e-02 : f32
    %112 = vector.broadcast %cst_20 : f32 to vector<1x128xf32>
    %113 = arith.mulf %109, %112 : vector<1x128xf32>
    %114 = arith.mulf %111, %111 : vector<1x128xf32>
    %115 = arith.subf %113, %114 : vector<1x128xf32>
    %cst_21 = arith.constant 0.000000e+00 : f32
    %116 = vector.broadcast %cst_21 : f32 to vector<1x128xf32>
    %117 = arith.maximumf %115, %116 : vector<1x128xf32>
    %c16 = arith.constant 16 : index
    %118 = memref.load %arg2[%c16] : memref<39xf32, #tpu.memory_space<smem>>
    %cst_22 = arith.constant 9.99999974E-6 : f32
    %119 = vector.broadcast %cst_22 : f32 to vector<1x128xf32>
    %120 = arith.addf %117, %119 : vector<1x128xf32>
    %121 = math.rsqrt %120 : vector<1x128xf32>
    %122 = vector.broadcast %118 : f32 to vector<1x128xf32>
    %123 = arith.mulf %122, %121 : vector<1x128xf32>
    %c18 = arith.constant 18 : index
    %124 = memref.load %arg2[%c18] : memref<39xf32, #tpu.memory_space<smem>>
    %125 = arith.mulf %111, %123 : vector<1x128xf32>
    %126 = vector.broadcast %124 : f32 to vector<1x128xf32>
    %127 = arith.subf %126, %125 : vector<1x128xf32>
    %128 = vector.broadcast %123 : vector<1x128xf32> to vector<64x128xf32>
    %129 = arith.mulf %104, %128 : vector<64x128xf32>
    %130 = vector.broadcast %127 : vector<1x128xf32> to vector<64x128xf32>
    %131 = arith.addf %129, %130 : vector<64x128xf32>
    %cst_23 = arith.constant 0.000000e+00 : f32
    %132 = vector.broadcast %cst_23 : f32 to vector<64x128xf32>
    %133 = arith.maximumf %102, %132 : vector<64x128xf32>
    %cst_24 = arith.constant dense<0.000000e+00> : vector<128xf32>
    %134 = vector.multi_reduction <add>, %133, %cst_24 [0] : vector<64x128xf32> to vector<128xf32>
    %135 = vector.shape_cast %134 : vector<128xf32> to vector<1x128xf32>
    %136 = arith.mulf %133, %133 : vector<64x128xf32>
    %cst_25 = arith.constant dense<0.000000e+00> : vector<128xf32>
    %137 = vector.multi_reduction <add>, %136, %cst_25 [0] : vector<64x128xf32> to vector<128xf32>
    %138 = vector.shape_cast %137 : vector<128xf32> to vector<1x128xf32>
    %cst_26 = arith.constant 1.562500e-02 : f32
    %139 = vector.broadcast %cst_26 : f32 to vector<1x128xf32>
    %140 = arith.mulf %135, %139 : vector<1x128xf32>
    %cst_27 = arith.constant 1.562500e-02 : f32
    %141 = vector.broadcast %cst_27 : f32 to vector<1x128xf32>
    %142 = arith.mulf %138, %141 : vector<1x128xf32>
    %143 = arith.mulf %140, %140 : vector<1x128xf32>
    %144 = arith.subf %142, %143 : vector<1x128xf32>
    %cst_28 = arith.constant 0.000000e+00 : f32
    %145 = vector.broadcast %cst_28 : f32 to vector<1x128xf32>
    %146 = arith.maximumf %144, %145 : vector<1x128xf32>
    %c17 = arith.constant 17 : index
    %147 = memref.load %arg2[%c17] : memref<39xf32, #tpu.memory_space<smem>>
    %cst_29 = arith.constant 9.99999974E-6 : f32
    %148 = vector.broadcast %cst_29 : f32 to vector<1x128xf32>
    %149 = arith.addf %146, %148 : vector<1x128xf32>
    %150 = math.rsqrt %149 : vector<1x128xf32>
    %151 = vector.broadcast %147 : f32 to vector<1x128xf32>
    %152 = arith.mulf %151, %150 : vector<1x128xf32>
    %c19 = arith.constant 19 : index
    %153 = memref.load %arg2[%c19] : memref<39xf32, #tpu.memory_space<smem>>
    %154 = arith.mulf %140, %152 : vector<1x128xf32>
    %155 = vector.broadcast %153 : f32 to vector<1x128xf32>
    %156 = arith.subf %155, %154 : vector<1x128xf32>
    %157 = vector.broadcast %152 : vector<1x128xf32> to vector<64x128xf32>
    %158 = arith.mulf %133, %157 : vector<64x128xf32>
    %159 = vector.broadcast %156 : vector<1x128xf32> to vector<64x128xf32>
    %160 = arith.addf %158, %159 : vector<64x128xf32>
    %c20 = arith.constant 20 : index
    %161 = memref.load %arg2[%c20] : memref<39xf32, #tpu.memory_space<smem>>
    %162 = vector.broadcast %161 : f32 to vector<64x128xf32>
    %163 = arith.mulf %131, %162 : vector<64x128xf32>
    %c24 = arith.constant 24 : index
    %164 = memref.load %arg2[%c24] : memref<39xf32, #tpu.memory_space<smem>>
    %165 = vector.broadcast %164 : f32 to vector<64x128xf32>
    %166 = arith.addf %163, %165 : vector<64x128xf32>
    %c22 = arith.constant 22 : index
    %167 = memref.load %arg2[%c22] : memref<39xf32, #tpu.memory_space<smem>>
    %168 = vector.broadcast %167 : f32 to vector<64x128xf32>
    %169 = arith.mulf %160, %168 : vector<64x128xf32>
    %170 = arith.addf %166, %169 : vector<64x128xf32>
    %c21 = arith.constant 21 : index
    %171 = memref.load %arg2[%c21] : memref<39xf32, #tpu.memory_space<smem>>
    %172 = vector.broadcast %171 : f32 to vector<64x128xf32>
    %173 = arith.mulf %131, %172 : vector<64x128xf32>
    %c25 = arith.constant 25 : index
    %174 = memref.load %arg2[%c25] : memref<39xf32, #tpu.memory_space<smem>>
    %175 = vector.broadcast %174 : f32 to vector<64x128xf32>
    %176 = arith.addf %173, %175 : vector<64x128xf32>
    %c23 = arith.constant 23 : index
    %177 = memref.load %arg2[%c23] : memref<39xf32, #tpu.memory_space<smem>>
    %178 = vector.broadcast %177 : f32 to vector<64x128xf32>
    %179 = arith.mulf %160, %178 : vector<64x128xf32>
    %180 = arith.addf %176, %179 : vector<64x128xf32>
    %cst_30 = arith.constant 0.000000e+00 : f32
    %181 = vector.broadcast %cst_30 : f32 to vector<64x128xf32>
    %182 = arith.maximumf %170, %181 : vector<64x128xf32>
    %cst_31 = arith.constant dense<0.000000e+00> : vector<128xf32>
    %183 = vector.multi_reduction <add>, %182, %cst_31 [0] : vector<64x128xf32> to vector<128xf32>
    %184 = vector.shape_cast %183 : vector<128xf32> to vector<1x128xf32>
    %185 = arith.mulf %182, %182 : vector<64x128xf32>
    %cst_32 = arith.constant dense<0.000000e+00> : vector<128xf32>
    %186 = vector.multi_reduction <add>, %185, %cst_32 [0] : vector<64x128xf32> to vector<128xf32>
    %187 = vector.shape_cast %186 : vector<128xf32> to vector<1x128xf32>
    %cst_33 = arith.constant 1.562500e-02 : f32
    %188 = vector.broadcast %cst_33 : f32 to vector<1x128xf32>
    %189 = arith.mulf %184, %188 : vector<1x128xf32>
    %cst_34 = arith.constant 1.562500e-02 : f32
    %190 = vector.broadcast %cst_34 : f32 to vector<1x128xf32>
    %191 = arith.mulf %187, %190 : vector<1x128xf32>
    %192 = arith.mulf %189, %189 : vector<1x128xf32>
    %193 = arith.subf %191, %192 : vector<1x128xf32>
    %cst_35 = arith.constant 0.000000e+00 : f32
    %194 = vector.broadcast %cst_35 : f32 to vector<1x128xf32>
    %195 = arith.maximumf %193, %194 : vector<1x128xf32>
    %c26 = arith.constant 26 : index
    %196 = memref.load %arg2[%c26] : memref<39xf32, #tpu.memory_space<smem>>
    %cst_36 = arith.constant 9.99999974E-6 : f32
    %197 = vector.broadcast %cst_36 : f32 to vector<1x128xf32>
    %198 = arith.addf %195, %197 : vector<1x128xf32>
    %199 = math.rsqrt %198 : vector<1x128xf32>
    %200 = vector.broadcast %196 : f32 to vector<1x128xf32>
    %201 = arith.mulf %200, %199 : vector<1x128xf32>
    %c28 = arith.constant 28 : index
    %202 = memref.load %arg2[%c28] : memref<39xf32, #tpu.memory_space<smem>>
    %203 = arith.mulf %189, %201 : vector<1x128xf32>
    %204 = vector.broadcast %202 : f32 to vector<1x128xf32>
    %205 = arith.subf %204, %203 : vector<1x128xf32>
    %206 = vector.broadcast %201 : vector<1x128xf32> to vector<64x128xf32>
    %207 = arith.mulf %182, %206 : vector<64x128xf32>
    %208 = vector.broadcast %205 : vector<1x128xf32> to vector<64x128xf32>
    %209 = arith.addf %207, %208 : vector<64x128xf32>
    %cst_37 = arith.constant 0.000000e+00 : f32
    %210 = vector.broadcast %cst_37 : f32 to vector<64x128xf32>
    %211 = arith.maximumf %180, %210 : vector<64x128xf32>
    %cst_38 = arith.constant dense<0.000000e+00> : vector<128xf32>
    %212 = vector.multi_reduction <add>, %211, %cst_38 [0] : vector<64x128xf32> to vector<128xf32>
    %213 = vector.shape_cast %212 : vector<128xf32> to vector<1x128xf32>
    %214 = arith.mulf %211, %211 : vector<64x128xf32>
    %cst_39 = arith.constant dense<0.000000e+00> : vector<128xf32>
    %215 = vector.multi_reduction <add>, %214, %cst_39 [0] : vector<64x128xf32> to vector<128xf32>
    %216 = vector.shape_cast %215 : vector<128xf32> to vector<1x128xf32>
    %cst_40 = arith.constant 1.562500e-02 : f32
    %217 = vector.broadcast %cst_40 : f32 to vector<1x128xf32>
    %218 = arith.mulf %213, %217 : vector<1x128xf32>
    %cst_41 = arith.constant 1.562500e-02 : f32
    %219 = vector.broadcast %cst_41 : f32 to vector<1x128xf32>
    %220 = arith.mulf %216, %219 : vector<1x128xf32>
    %221 = arith.mulf %218, %218 : vector<1x128xf32>
    %222 = arith.subf %220, %221 : vector<1x128xf32>
    %cst_42 = arith.constant 0.000000e+00 : f32
    %223 = vector.broadcast %cst_42 : f32 to vector<1x128xf32>
    %224 = arith.maximumf %222, %223 : vector<1x128xf32>
    %c27 = arith.constant 27 : index
    %225 = memref.load %arg2[%c27] : memref<39xf32, #tpu.memory_space<smem>>
    %cst_43 = arith.constant 9.99999974E-6 : f32
    %226 = vector.broadcast %cst_43 : f32 to vector<1x128xf32>
    %227 = arith.addf %224, %226 : vector<1x128xf32>
    %228 = math.rsqrt %227 : vector<1x128xf32>
    %229 = vector.broadcast %225 : f32 to vector<1x128xf32>
    %230 = arith.mulf %229, %228 : vector<1x128xf32>
    %c29 = arith.constant 29 : index
    %231 = memref.load %arg2[%c29] : memref<39xf32, #tpu.memory_space<smem>>
    %232 = arith.mulf %218, %230 : vector<1x128xf32>
    %233 = vector.broadcast %231 : f32 to vector<1x128xf32>
    %234 = arith.subf %233, %232 : vector<1x128xf32>
    %235 = vector.broadcast %230 : vector<1x128xf32> to vector<64x128xf32>
    %236 = arith.mulf %211, %235 : vector<64x128xf32>
    %237 = vector.broadcast %234 : vector<1x128xf32> to vector<64x128xf32>
    %238 = arith.addf %236, %237 : vector<64x128xf32>
    %c30 = arith.constant 30 : index
    %239 = memref.load %arg2[%c30] : memref<39xf32, #tpu.memory_space<smem>>
    %240 = vector.broadcast %239 : f32 to vector<64x128xf32>
    %241 = arith.mulf %209, %240 : vector<64x128xf32>
    %c36 = arith.constant 36 : index
    %242 = memref.load %arg2[%c36] : memref<39xf32, #tpu.memory_space<smem>>
    %243 = vector.broadcast %242 : f32 to vector<64x128xf32>
    %244 = arith.addf %241, %243 : vector<64x128xf32>
    %c33 = arith.constant 33 : index
    %245 = memref.load %arg2[%c33] : memref<39xf32, #tpu.memory_space<smem>>
    %246 = vector.broadcast %245 : f32 to vector<64x128xf32>
    %247 = arith.mulf %238, %246 : vector<64x128xf32>
    %248 = arith.addf %244, %247 : vector<64x128xf32>
    %c31 = arith.constant 31 : index
    %249 = memref.load %arg2[%c31] : memref<39xf32, #tpu.memory_space<smem>>
    %250 = vector.broadcast %249 : f32 to vector<64x128xf32>
    %251 = arith.mulf %209, %250 : vector<64x128xf32>
    %c37 = arith.constant 37 : index
    %252 = memref.load %arg2[%c37] : memref<39xf32, #tpu.memory_space<smem>>
    %253 = vector.broadcast %252 : f32 to vector<64x128xf32>
    %254 = arith.addf %251, %253 : vector<64x128xf32>
    %c34 = arith.constant 34 : index
    %255 = memref.load %arg2[%c34] : memref<39xf32, #tpu.memory_space<smem>>
    %256 = vector.broadcast %255 : f32 to vector<64x128xf32>
    %257 = arith.mulf %238, %256 : vector<64x128xf32>
    %258 = arith.addf %254, %257 : vector<64x128xf32>
    %c32 = arith.constant 32 : index
    %259 = memref.load %arg2[%c32] : memref<39xf32, #tpu.memory_space<smem>>
    %260 = vector.broadcast %259 : f32 to vector<64x128xf32>
    %261 = arith.mulf %209, %260 : vector<64x128xf32>
    %c38 = arith.constant 38 : index
    %262 = memref.load %arg2[%c38] : memref<39xf32, #tpu.memory_space<smem>>
    %263 = vector.broadcast %262 : f32 to vector<64x128xf32>
    %264 = arith.addf %261, %263 : vector<64x128xf32>
    %c35 = arith.constant 35 : index
    %265 = memref.load %arg2[%c35] : memref<39xf32, #tpu.memory_space<smem>>
    %266 = vector.broadcast %265 : f32 to vector<64x128xf32>
    %267 = arith.mulf %238, %266 : vector<64x128xf32>
    %268 = arith.addf %264, %267 : vector<64x128xf32>
    %269 = arith.maximumf %248, %258 : vector<64x128xf32>
    %270 = arith.maximumf %269, %268 : vector<64x128xf32>
    %271 = arith.subf %248, %270 : vector<64x128xf32>
    %272 = math.exp %271 : vector<64x128xf32>
    %273 = arith.subf %258, %270 : vector<64x128xf32>
    %274 = math.exp %273 : vector<64x128xf32>
    %275 = arith.subf %268, %270 : vector<64x128xf32>
    %276 = math.exp %275 : vector<64x128xf32>
    %277 = arith.addf %272, %274 : vector<64x128xf32>
    %278 = arith.addf %277, %276 : vector<64x128xf32>
    %cst_44 = arith.constant 1.000000e+00 : f32
    %279 = vector.broadcast %cst_44 : f32 to vector<64x128xf32>
    %280 = arith.divf %279, %278 : vector<64x128xf32>
    %281 = arith.mulf %272, %280 : vector<64x128xf32>
    %c0_45 = arith.constant 0 : index
    %c0_46 = arith.constant 0 : index
    %c0_47 = arith.constant 0 : index
    %282 = vector.load %arg3[%c0_45, %c0_46, %c0_47] : memref<3x64x128xf32, #tpu.memory_space<vmem>>, vector<1x64x128xf32>
    %283 = vector.shape_cast %282 : vector<1x64x128xf32> to vector<64x128xf32>
    %284 = vector.shape_cast %281 : vector<64x128xf32> to vector<1x64x128xf32>
    tpu.vector_store %arg3[%c0_45, %c0_46, %c0_47], %284 {strides = array<i32>} : memref<3x64x128xf32, #tpu.memory_space<vmem>>, vector<1x64x128xf32>,
    %285 = arith.mulf %274, %280 : vector<64x128xf32>
    %c1_48 = arith.constant 1 : index
    %c0_49 = arith.constant 0 : index
    %c0_50 = arith.constant 0 : index
    %286 = vector.load %arg3[%c1_48, %c0_49, %c0_50] : memref<3x64x128xf32, #tpu.memory_space<vmem>>, vector<1x64x128xf32>
    %287 = vector.shape_cast %286 : vector<1x64x128xf32> to vector<64x128xf32>
    %288 = vector.shape_cast %285 : vector<64x128xf32> to vector<1x64x128xf32>
    tpu.vector_store %arg3[%c1_48, %c0_49, %c0_50], %288 {strides = array<i32>} : memref<3x64x128xf32, #tpu.memory_space<vmem>>, vector<1x64x128xf32>,
    %289 = arith.mulf %276, %280 : vector<64x128xf32>
    %c2_51 = arith.constant 2 : index
    %c0_52 = arith.constant 0 : index
    %c0_53 = arith.constant 0 : index
    %290 = vector.load %arg3[%c2_51, %c0_52, %c0_53] : memref<3x64x128xf32, #tpu.memory_space<vmem>>, vector<1x64x128xf32>
    %291 = vector.shape_cast %290 : vector<1x64x128xf32> to vector<64x128xf32>
    %292 = vector.shape_cast %289 : vector<64x128xf32> to vector<1x64x128xf32>
    tpu.vector_store %arg3[%c2_51, %c0_52, %c0_53], %292 {strides = array<i32>} : memref<3x64x128xf32, #tpu.memory_space<vmem>>, vector<1x64x128xf32>,
    return
  }
  func.func @transform_0(%arg0: i32) -> (i32, i32, i32) {
    %c0_i32 = arith.constant 0 : i32
    %c0_i32_0 = arith.constant 0 : i32
    %c0_i32_1 = arith.constant 0 : i32
    return %c0_i32, %c0_i32_0, %arg0 : i32, i32, i32
  }
  func.func @transform_1(%arg0: i32) -> i32 {
    %c0_i32 = arith.constant 0 : i32
    %c0_i32_0 = arith.constant 0 : i32
    return %c0_i32 : i32
  }
  func.func @transform_2(%arg0: i32) -> (i32, i32, i32) {
    %c0_i32 = arith.constant 0 : i32
    %c0_i32_0 = arith.constant 0 : i32
    %c0_i32_1 = arith.constant 0 : i32
    return %c0_i32, %c0_i32_0, %arg0 : i32, i32, i32
  }
}

</mosaic_0001>

<llo_original>
// kernel: forward_fm.1
$region0: #{forward_fm.1}
  #allocation0 [shape = 'u32[]', space=smem, size = 0x4, offset = 0x4, fixed_abs, tag = 'smem constant byte address 0x4 - core index']
  #allocation1 [shape = 'u32[144,128]{1,0:T(1,128)}', space=vmem, size = 0x12000, scoped, tag = 'internal scratch']
  %s0 = inlined_call_operand.hbm [shape: f32[2,64,256], index: 0, kind: input, shape index: {}]
  %s1 = inlined_call_operand.vmem [shape: f32[39], index: 1, kind: input, shape index: {}]
  %s2 = inlined_call_operand.hbm [shape: f32[3,64,256], index: 2, kind: output, shape index: {}]
  %s3 = sld [smem:[#allocation0]]
  $region49: #{forward_fm.1} parent=0
    _
  %s5 = ssub.s32 1, %s3
  %s6 = scalar_select 0, %s5, %s3
  $region1: #{forward_fm.1} parent=0
    #allocation2 [shape = 'u8[131072]{0}', space=vmem, size = 0x20000, scoped, tag = 'input window, operand 0']
    #allocation3 [shape = 's32[2]{0}', space=sflag, size = 0x8, scoped, tag = 'scoped memory for forward_fm.1']
    #allocation4 [shape = 's32[2]{0}', space=sflag, size = 0x8, scoped, tag = 'scoped memory for forward_fm.1']
    #allocation5 [shape = 's32[2]{0}', space=sflag, size = 0x8, scoped, tag = 'scoped memory for forward_fm.1']
    #allocation6 [shape = 'u8[512]{0}', space=smem, size = 0x200, scoped, tag = 'input window, operand 1, single buffered']
    #allocation7 [shape = 'u8[196608]{0}', space=vmem, size = 0x30000, scoped, tag = 'output window, operand 0']
    %7 = vsyncpa [#allocation3], 0
    %s8 = scalar_lea.sflag [#allocation3], 1
    %9 = vsyncpa %s8, 0
    %10 = vsyncpa [#allocation5], 0
    %11 = vsyncpa [#allocation4], 0
    %s12 = scalar_lea.sflag [#allocation4], 1
    %13 = vsyncpa %s12, 0
    loop: start=0, step=1, limit=4
    $region2: #{forward_fm.1} parent=1 // loop_pre_header
      _
    $region3: #{forward_fm.1} parent=1 // loop_header
      %s15 = sphi 0, %s19
      %p16 = scmp.ge.s32.totalorder %s15, 4
      %s25 = sphi 0, %s27
      %s28 = sphi 0, %s25
      %s29 = sphi 0, %s28
      %s45 = sphi 0, %s29
      %s49 = sphi 0, %s49
      %s51 = sphi 0, %s49
      %s52 = sphi 0, %s51
      %s66 = sphi 0, %s52
      %s72 = sphi 0, %s74
      %s75 = sphi 0, %s72
      %s76 = sphi 0, %s75
      %s92 = sphi 0, %s76
    $region4: #{forward_fm.1} parent=1 // loop_header_branch
      %18 = sbr.rel (%p16) target = $region8
    $region5: #{forward_fm.1} parent=1 // loop_body
      %s20 = ssub.s32 %s15, 1
      %s21 = ssub.s32 %s15, 2
      %s22 = sadd.s32 %s15, 1
      %s23 = ssub.s32 %s15, %s22
      %p24 = scmp.eq.s32.totalorder %s23, 0
      %s26 = sadd.s32 %s25, 1
      %s27 = scalar_select %p24, %s25, %s26
      %p30 = pneg %p24
      %p31 = scmp.eq.s32.totalorder %s15, 1
      %p32 = por %p30, %p31
      %p33 = scmp.ne.s32.totalorder %s25, %s28
      %p34 = scmp.eq.s32.totalorder %s15, 0
      %p35 = por %p33, %p34
      %p36 = scmp.ne.s32.totalorder %s25, %s28
      %p37 = scmp.eq.s32.totalorder %s20, 1
      %p38 = por %p36, %p37
      %p39 = scmp.ne.s32.totalorder %s28, %s29
      %p40 = scmp.eq.s32.totalorder %s20, 0
      %p41 = por %p39, %p40
      %p42 = scmp.ne.s32.totalorder %s28, %s29
      %p43 = scmp.eq.s32.totalorder %s21, 1
      %p44 = por %p42, %p43
      %p46 = scmp.ne.s32.totalorder %s29, %s45
      %p47 = scmp.eq.s32.totalorder %s21, 0
      %p48 = por %p46, %p47
      %s50 = sadd.s32 %s49, 1
      %p53 = scmp.eq.s32.totalorder %s15, 1
      %p54 = scmp.ne.s32.totalorder %s49, %s51
      %p55 = scmp.eq.s32.totalorder %s15, 0
      %p56 = por %p54, %p55
      %p57 = scmp.ne.s32.totalorder %s49, %s51
      %p58 = scmp.eq.s32.totalorder %s20, 1
      %p59 = por %p57, %p58
      %p60 = scmp.ne.s32.totalorder %s51, %s52
      %p61 = scmp.eq.s32.totalorder %s20, 0
      %p62 = por %p60, %p61
      %p63 = scmp.ne.s32.totalorder %s51, %s52
      %p64 = scmp.eq.s32.totalorder %s21, 1
      %p65 = por %p63, %p64
      %p67 = scmp.ne.s32.totalorder %s52, %s66
      %p68 = scmp.eq.s32.totalorder %s21, 0
      %p69 = por %p67, %p68
      %s70 = ssub.s32 %s15, %s22
      %p71 = scmp.eq.s32.totalorder %s70, 0
      %s73 = sadd.s32 %s72, 1
      %s74 = scalar_select %p71, %s72, %s73
      %p77 = pneg %p71
      %p78 = scmp.eq.s32.totalorder %s15, 1
      %p79 = por %p77, %p78
      %p80 = scmp.ne.s32.totalorder %s72, %s75
      %p81 = scmp.eq.s32.totalorder %s15, 0
      %p82 = por %p80, %p81
      %p83 = scmp.ne.s32.totalorder %s72, %s75
      %p84 = scmp.eq.s32.totalorder %s20, 1
      %p85 = por %p83, %p84
      %p86 = scmp.ne.s32.totalorder %s75, %s76
      %p87 = scmp.eq.s32.totalorder %s20, 0
      %p88 = por %p86, %p87
      %p89 = scmp.ne.s32.totalorder %s75, %s76
      %p90 = scmp.eq.s32.totalorder %s21, 1
      %p91 = por %p89, %p90
      %p93 = scmp.ne.s32.totalorder %s76, %s92
      %p94 = scmp.eq.s32.totalorder %s21, 0
      %p95 = por %p93, %p94
      %p96 = scmp.le.s32.totalorder 1, %s15
      %p97 = scmp.lt.s32.totalorder %s15, 3
      %p98 = pnand %p96, %p97
      %p99 = pneg %p98
      // Predicated region
      $region9: #{forward_fm.1} parent=5 // pred_check
        _
      $region10: #{forward_fm.1} parent=5 // pred_check_branch
        %101 = sbr.rel (%p98) target = $region12
      $region11: #{forward_fm.1} parent=5 // pred_region
        %s102 = ssub.s32 %s15, 1
        // Predicated region
        $region13: #{forward_fm.1} parent=11 // pred_check
          %p103 = pneg %p62
        $region14: #{forward_fm.1} parent=11 // pred_check_branch
          %105 = sbr.rel (%p103) target = $region16
        $region15: #{forward_fm.1} parent=11 // pred_region
          %s107 = ssub.s32 16, 16
          %108 = vsyncadd [#allocation5], %s107
          %s110 = sshll.u32 %s1, 4
          %s111 = int_to_ptr.vmem [resolvable:$true] %s110
          %113 = dma.vmem_to_smem %s111, 16, [#allocation6], [#allocation5]
        $region16: #{forward_fm.1} parent=11 // pred_fallthru
          _
      $region12: #{forward_fm.1} parent=5 // pred_fallthru
        _
      %p114 = scmp.lt.s32.totalorder %s15, 2
      // Predicated region
      $region17: #{forward_fm.1} parent=5 // pred_check
        %p115 = pneg %p114
      $region18: #{forward_fm.1} parent=5 // pred_check_branch
        %117 = sbr.rel (%p115) target = $region20
      $region19: #{forward_fm.1} parent=5 // pred_region
        // Predicated region
        $region21: #{forward_fm.1} parent=19 // pred_check
          %p118 = pneg %p35
        $region22: #{forward_fm.1} parent=19 // pred_check_branch
          %120 = sbr.rel (%p118) target = $region24
        $region23: #{forward_fm.1} parent=19 // pred_region
          %s121 = sand.u32 %s25, 1
          %s122 = scalar_lea.sflag [#allocation3], %s121
          %s123 = sand.u32 %s25, 1
          %s124 = smul.addr %s123, 128
          %s125 = scalar_lea.vmem [#allocation2], %s124
          %s127 = ssub.s32 2048, 2048
          %128 = vsyncadd %s122, %s127
          %s129 = smul.addr %s15, 128
          %s130 = scalar_lea.hbm %s0, %s129
          %s131 = sshll.u32 %s125, 4
          %s132 = int_to_ptr.vmem [resolvable:$true] %s131
          %137 = dma.hbm_to_vmem [thread:$0]  %s130, 2048, %s132, %s122, 256, 128, 8
        $region24: #{forward_fm.1} parent=19 // pred_fallthru
          _
      $region20: #{forward_fm.1} parent=5 // pred_fallthru
        _
      %p138 = scmp.le.s32.totalorder 1, %s15
      %p139 = scmp.lt.s32.totalorder %s15, 3
      %p140 = pnand %p138, %p139
      %p141 = pneg %p140
      // Predicated region
      $region25: #{forward_fm.1} parent=5 // pred_check
        _
      $region26: #{forward_fm.1} parent=5 // pred_check_branch
        %143 = sbr.rel (%p140) target = $region28
      $region27: #{forward_fm.1} parent=5 // pred_region
        %s144 = ssub.s32 %s15, 1
        %s145 = sand.u32 %s28, 1
        %s146 = scalar_lea.sflag [#allocation3], %s145
        %s147 = sand.u32 %s28, 1
        %s148 = smul.addr %s147, 128
        %s149 = scalar_lea.vmem [#allocation2], %s148
        // Predicated region
        $region29: #{forward_fm.1} parent=27 // pred_check
          %p150 = pneg %p41
        $region30: #{forward_fm.1} parent=27 // pred_check_branch
          %152 = sbr.rel (%p150) target = $region32
        $region31: #{forward_fm.1} parent=27 // pred_region
          %153 = dma.done %s146, 2048
        $region32: #{forward_fm.1} parent=27 // pred_fallthru
          _
        // Predicated region
        $region33: #{forward_fm.1} parent=27 // pred_check
          %p154 = pneg %p62
        $region34: #{forward_fm.1} parent=27 // pred_check_branch
          %156 = sbr.rel (%p154) target = $region36
        $region35: #{forward_fm.1} parent=27 // pred_region
          %157 = dma.done [#allocation5], 16
        $region36: #{forward_fm.1} parent=27 // pred_fallthru
          _
        %158 = sfence
        %s159 = sand.u32 %s28, 1
        %s160 = scalar_lea.sflag [#allocation3], %s159
        %s161 = sand.u32 %s28, 1
        %s162 = smul.addr %s161, 128
        %s163 = scalar_lea.vmem [#allocation2], %s162
        %p164 = pneg %p41
        %p165 = pneg %p38
        %p166 = pneg %p62
        %p167 = pneg %p59
        %p168 = pneg %p88
        %p169 = pneg %p85
        %s170 = sand.u32 %s75, 1
        %s171 = scalar_lea.sflag [#allocation4], %s170
        %s172 = sand.u32 %s75, 1
        %s173 = smul.addr %s172, 192
        %s174 = scalar_lea.vmem [#allocation7], %s173
        %v175 = vld [vmem:[%s149] sm:$0xff]
        %v176 = vld [vmem:[%s149 + $0x8] sm:$0xff]
        %v177 = vld [vmem:[%s149 + $0x10] sm:$0xff]
        %v178 = vld [vmem:[%s149 + $0x18] sm:$0xff]
        %v179 = vld [vmem:[%s149 + $0x20] sm:$0xff]
        %v180 = vld [vmem:[%s149 + $0x28] sm:$0xff]
        %v181 = vld [vmem:[%s149 + $0x30] sm:$0xff]
        %v182 = vld [vmem:[%s149 + $0x38] sm:$0xff]
        %v183 = vld [vmem:[%s149 + $0x40] sm:$0xff]
        %v184 = vld [vmem:[%s149 + $0x48] sm:$0xff]
        %v185 = vld [vmem:[%s149 + $0x50] sm:$0xff]
        %v186 = vld [vmem:[%s149 + $0x58] sm:$0xff]
        %v187 = vld [vmem:[%s149 + $0x60] sm:$0xff]
        %v188 = vld [vmem:[%s149 + $0x68] sm:$0xff]
        %v189 = vld [vmem:[%s149 + $0x70] sm:$0xff]
        %v190 = vld [vmem:[%s149 + $0x78] sm:$0xff]
        %s191 = sld [smem:[#allocation6]]
        %v192 = vstv %s191
        %v193 = vmul.f32 %v175, %v192
        %v194 = vmul.f32 %v176, %v192
        %v195 = vmul.f32 %v177, %v192
        %v196 = vmul.f32 %v178, %v192
        %v197 = vmul.f32 %v179, %v192
        %v198 = vmul.f32 %v180, %v192
        %v199 = vmul.f32 %v181, %v192
        %v200 = vmul.f32 %v182, %v192
        %s201 = sld [smem:[#allocation6 + $0x4]]
        %v202 = vstv %s201
        %v203 = vadd.f32 %v193, %v202
        %v204 = vadd.f32 %v194, %v202
        %v205 = vadd.f32 %v195, %v202
        %v206 = vadd.f32 %v196, %v202
        %v207 = vadd.f32 %v197, %v202
        %v208 = vadd.f32 %v198, %v202
        %v209 = vadd.f32 %v199, %v202
        %v210 = vadd.f32 %v200, %v202
        %s211 = sld [smem:[#allocation6 + $0x2]]
        %v212 = vstv %s211
        %v213 = vmul.f32 %v183, %v212
        %v214 = vmul.f32 %v184, %v212
        %v215 = vmul.f32 %v185, %v212
        %v216 = vmul.f32 %v186, %v212
        %v217 = vmul.f32 %v187, %v212
        %v218 = vmul.f32 %v188, %v212
        %v219 = vmul.f32 %v189, %v212
        %v220 = vmul.f32 %v190, %v212
        %v221 = vadd.f32 %v203, %v213
        %v222 = vadd.f32 %v204, %v214
        %v223 = vadd.f32 %v205, %v215
        %v224 = vadd.f32 %v206, %v216
        %v225 = vadd.f32 %v207, %v217
        %v226 = vadd.f32 %v208, %v218
        %v227 = vadd.f32 %v209, %v219
        %v228 = vadd.f32 %v210, %v220
        %s229 = sld [smem:[#allocation6 + $0x1]]
        %v230 = vstv %s229
        %v231 = vmul.f32 %v175, %v230
        %v232 = vmul.f32 %v176, %v230
        %v233 = vmul.f32 %v177, %v230
        %v234 = vmul.f32 %v178, %v230
        %v235 = vmul.f32 %v179, %v230
        %v236 = vmul.f32 %v180, %v230
        %v237 = vmul.f32 %v181, %v230
        %v238 = vmul.f32 %v182, %v230
        %s239 = sld [smem:[#allocation6 + $0x5]]
        %v240 = vstv %s239
        %v241 = vadd.f32 %v231, %v240
        %v242 = vadd.f32 %v232, %v240
        %v243 = vadd.f32 %v233, %v240
        %v244 = vadd.f32 %v234, %v240
        %v245 = vadd.f32 %v235, %v240
        %v246 = vadd.f32 %v236, %v240
        %v247 = vadd.f32 %v237, %v240
        %v248 = vadd.f32 %v238, %v240
        %s249 = sld [smem:[#allocation6 + $0x3]]
        %v250 = vstv %s249
        %v251 = vmul.f32 %v183, %v250
        %v252 = vmul.f32 %v184, %v250
        %v253 = vmul.f32 %v185, %v250
        %v254 = vmul.f32 %v186, %v250
        %v255 = vmul.f32 %v187, %v250
        %v256 = vmul.f32 %v188, %v250
        %v257 = vmul.f32 %v189, %v250
        %v258 = vmul.f32 %v190, %v250
        %v259 = vadd.f32 %v241, %v251
        %v260 = vadd.f32 %v242, %v252
        %v261 = vadd.f32 %v243, %v253
        %v262 = vadd.f32 %v244, %v254
        %v263 = vadd.f32 %v245, %v255
        %v264 = vadd.f32 %v246, %v256
        %v265 = vadd.f32 %v247, %v257
        %v266 = vadd.f32 %v248, %v258
        %v267 = vmax.f32 %v221, 0.0
        %v268 = vmax.f32 %v222, 0.0
        %v269 = vmax.f32 %v223, 0.0
        %v270 = vmax.f32 %v224, 0.0
        %v271 = vmax.f32 %v225, 0.0
        %v272 = vmax.f32 %v226, 0.0
        %v273 = vmax.f32 %v227, 0.0
        %v274 = vmax.f32 %v228, 0.0
        %v275 = vadd.f32 %v267, %v268
        %v276 = vadd.f32 %v275, %v269
        %v277 = vadd.f32 %v276, %v270
        %v278 = vadd.f32 %v277, %v271
        %v279 = vadd.f32 %v278, %v272
        %v280 = vadd.f32 %v279, %v273
        %v281 = vadd.f32 %v280, %v274
        %v282 = vrot.slane %v281, 4
        %v283 = vadd.f32 %v281, %v282
        %v284 = vrot.slane %v283, 2
        %v285 = vadd.f32 %v283, %v284
        %v286 = vrot.slane %v285, 1
        %v287 = vadd.f32 %v285, %v286
        %v288 = vmul.f32 %v267, %v267
        %v289 = vmul.f32 %v268, %v268
        %v290 = vmul.f32 %v269, %v269
        %v291 = vmul.f32 %v270, %v270
        %v292 = vmul.f32 %v271, %v271
        %v293 = vmul.f32 %v272, %v272
        %v294 = vmul.f32 %v273, %v273
        %v295 = vmul.f32 %v274, %v274
        %v296 = vadd.f32 %v288, %v289
        %v297 = vadd.f32 %v296, %v290
        %v298 = vadd.f32 %v297, %v291
        %v299 = vadd.f32 %v298, %v292
        %v300 = vadd.f32 %v299, %v293
        %v301 = vadd.f32 %v300, %v294
        %v302 = vadd.f32 %v301, %v295
        %v303 = vrot.slane %v302, 4
        %v304 = vadd.f32 %v302, %v303
        %v305 = vrot.slane %v304, 2
        %v306 = vadd.f32 %v304, %v305
        %v307 = vrot.slane %v306, 1
        %v308 = vadd.f32 %v306, %v307
        %v309 = vmul.f32 %v287, 0.015625
        %v310 = vmul.f32 %v308, 0.015625
        %v311 = vmul.f32 %v309, %v309
        %v312 = vsub.f32 %v310, %v311
        %v313 = vmax.f32 %v312, 0.0
        %s314 = sld [smem:[#allocation6 + $0x6]]
        %v315 = vadd.f32 %v313, 1e-05
        %v316 = vrsqrt.pop %v315
        %v317 = vstv %s314
        %v318 = vmul.f32 %v317, %v316
        %s319 = sld [smem:[#allocation6 + $0x8]]
        %v320 = vmul.f32 %v309, %v318
        %v321 = vstv %s319
        %v322 = vsub.f32 %v321, %v320
        %v323 = vmul.f32 %v267, %v318
        %v324 = vmul.f32 %v268, %v318
        %v325 = vmul.f32 %v269, %v318
        %v326 = vmul.f32 %v270, %v318
        %v327 = vmul.f32 %v271, %v318
        %v328 = vmul.f32 %v272, %v318
        %v329 = vmul.f32 %v273, %v318
        %v330 = vmul.f32 %v274, %v318
        %v331 = vadd.f32 %v323, %v322
        %v332 = vadd.f32 %v324, %v322
        %v333 = vadd.f32 %v325, %v322
        %v334 = vadd.f32 %v326, %v322
        %v335 = vadd.f32 %v327, %v322
        %v336 = vadd.f32 %v328, %v322
        %v337 = vadd.f32 %v329, %v322
        %v338 = vadd.f32 %v330, %v322
        %v339 = vmax.f32 %v259, 0.0
        %v340 = vmax.f32 %v260, 0.0
        %v341 = vmax.f32 %v261, 0.0
        %v342 = vmax.f32 %v262, 0.0
        %v343 = vmax.f32 %v263, 0.0
        %v344 = vmax.f32 %v264, 0.0
        %v345 = vmax.f32 %v265, 0.0
        %v346 = vmax.f32 %v266, 0.0
        %v347 = vadd.f32 %v339, %v340
        %v348 = vadd.f32 %v347, %v341
        %v349 = vadd.f32 %v348, %v342
        %v350 = vadd.f32 %v349, %v343
        %v351 = vadd.f32 %v350, %v344
        %v352 = vadd.f32 %v351, %v345
        %v353 = vadd.f32 %v352, %v346
        %v354 = vrot.slane %v353, 4
        %v355 = vadd.f32 %v353, %v354
        %v356 = vrot.slane %v355, 2
        %v357 = vadd.f32 %v355, %v356
        %v358 = vrot.slane %v357, 1
        %v359 = vadd.f32 %v357, %v358
        %v360 = vmul.f32 %v339, %v339
        %v361 = vmul.f32 %v340, %v340
        %v362 = vmul.f32 %v341, %v341
        %v363 = vmul.f32 %v342, %v342
        %v364 = vmul.f32 %v343, %v343
        %v365 = vmul.f32 %v344, %v344
        %v366 = vmul.f32 %v345, %v345
        %v367 = vmul.f32 %v346, %v346
        %v368 = vadd.f32 %v360, %v361
        %v369 = vadd.f32 %v368, %v362
        %v370 = vadd.f32 %v369, %v363
        %v371 = vadd.f32 %v370, %v364
        %v372 = vadd.f32 %v371, %v365
        %v373 = vadd.f32 %v372, %v366
        %v374 = vadd.f32 %v373, %v367
        %v375 = vrot.slane %v374, 4
        %v376 = vadd.f32 %v374, %v375
        %v377 = vrot.slane %v376, 2
        %v378 = vadd.f32 %v376, %v377
        %v379 = vrot.slane %v378, 1
        %v380 = vadd.f32 %v378, %v379
        %v381 = vmul.f32 %v359, 0.015625
        %v382 = vmul.f32 %v380, 0.015625
        %v383 = vmul.f32 %v381, %v381
        %v384 = vsub.f32 %v382, %v383
        %v385 = vmax.f32 %v384, 0.0
        %s386 = sld [smem:[#allocation6 + $0x7]]
        %v387 = vadd.f32 %v385, 1e-05
        %v388 = vrsqrt.pop %v387
        %v389 = vstv %s386
        %v390 = vmul.f32 %v389, %v388
        %s391 = sld [smem:[#allocation6 + $0x9]]
        %v392 = vmul.f32 %v381, %v390
        %v393 = vstv %s391
        %v394 = vsub.f32 %v393, %v392
        %v395 = vmul.f32 %v339, %v390
        %v396 = vmul.f32 %v340, %v390
        %v397 = vmul.f32 %v341, %v390
        %v398 = vmul.f32 %v342, %v390
        %v399 = vmul.f32 %v343, %v390
        %v400 = vmul.f32 %v344, %v390
        %v401 = vmul.f32 %v345, %v390
        %v402 = vmul.f32 %v346, %v390
        %v403 = vadd.f32 %v395, %v394
        %v404 = vadd.f32 %v396, %v394
        %v405 = vadd.f32 %v397, %v394
        %v406 = vadd.f32 %v398, %v394
        %v407 = vadd.f32 %v399, %v394
        %v408 = vadd.f32 %v400, %v394
        %v409 = vadd.f32 %v401, %v394
        %v410 = vadd.f32 %v402, %v394
        %s411 = sld [smem:[#allocation6 + $0xa]]
        %v412 = vstv %s411
        %v413 = vmul.f32 %v331, %v412
        %v414 = vmul.f32 %v332, %v412
        %v415 = vmul.f32 %v333, %v412
        %v416 = vmul.f32 %v334, %v412
        %v417 = vmul.f32 %v335, %v412
        %v418 = vmul.f32 %v336, %v412
        %v419 = vmul.f32 %v337, %v412
        %v420 = vmul.f32 %v338, %v412
        %s421 = sld [smem:[#allocation6 + $0xe]]
        %v422 = vstv %s421
        %v423 = vadd.f32 %v413, %v422
        %v424 = vadd.f32 %v414, %v422
        %v425 = vadd.f32 %v415, %v422
        %v426 = vadd.f32 %v416, %v422
        %v427 = vadd.f32 %v417, %v422
        %v428 = vadd.f32 %v418, %v422
        %v429 = vadd.f32 %v419, %v422
        %v430 = vadd.f32 %v420, %v422
        %s431 = sld [smem:[#allocation6 + $0xc]]
        %v432 = vstv %s431
        %v433 = vmul.f32 %v403, %v432
        %v434 = vmul.f32 %v404, %v432
        %v435 = vmul.f32 %v405, %v432
        %v436 = vmul.f32 %v406, %v432
        %v437 = vmul.f32 %v407, %v432
        %v438 = vmul.f32 %v408, %v432
        %v439 = vmul.f32 %v409, %v432
        %v440 = vmul.f32 %v410, %v432
        %v441 = vadd.f32 %v423, %v433
        %v442 = vadd.f32 %v424, %v434
        %v443 = vadd.f32 %v425, %v435
        %v444 = vadd.f32 %v426, %v436
        %v445 = vadd.f32 %v427, %v437
        %v446 = vadd.f32 %v428, %v438
        %v447 = vadd.f32 %v429, %v439
        %v448 = vadd.f32 %v430, %v440
        %s449 = sld [smem:[#allocation6 + $0xb]]
        %v450 = vstv %s449
        %v451 = vmul.f32 %v331, %v450
        %v452 = vmul.f32 %v332, %v450
        %v453 = vmul.f32 %v333, %v450
        %v454 = vmul.f32 %v334, %v450
        %v455 = vmul.f32 %v335, %v450
        %v456 = vmul.f32 %v336, %v450
        %v457 = vmul.f32 %v337, %v450
        %v458 = vmul.f32 %v338, %v450
        %s459 = sld [smem:[#allocation6 + $0xf]]
        %v460 = vstv %s459
        %v461 = vadd.f32 %v451, %v460
        %v462 = vadd.f32 %v452, %v460
        %v463 = vadd.f32 %v453, %v460
        %v464 = vadd.f32 %v454, %v460
        %v465 = vadd.f32 %v455, %v460
        %v466 = vadd.f32 %v456, %v460
        %v467 = vadd.f32 %v457, %v460
        %v468 = vadd.f32 %v458, %v460
        %s469 = sld [smem:[#allocation6 + $0xd]]
        %v470 = vstv %s469
        %v471 = vmul.f32 %v403, %v470
        %v472 = vmul.f32 %v404, %v470
        %v473 = vmul.f32 %v405, %v470
        %v474 = vmul.f32 %v406, %v470
        %v475 = vmul.f32 %v407, %v470
        %v476 = vmul.f32 %v408, %v470
        %v477 = vmul.f32 %v409, %v470
        %v478 = vmul.f32 %v410, %v470
        %v479 = vadd.f32 %v461, %v471
        %v480 = vadd.f32 %v462, %v472
        %v481 = vadd.f32 %v463, %v473
        %v482 = vadd.f32 %v464, %v474
        %v483 = vadd.f32 %v465, %v475
        %v484 = vadd.f32 %v466, %v476
        %v485 = vadd.f32 %v467, %v477
        %v486 = vadd.f32 %v468, %v478
        %v487 = vmax.f32 %v441, 0.0
        %v488 = vmax.f32 %v442, 0.0
        %v489 = vmax.f32 %v443, 0.0
        %v490 = vmax.f32 %v444, 0.0
        %v491 = vmax.f32 %v445, 0.0
        %v492 = vmax.f32 %v446, 0.0
        %v493 = vmax.f32 %v447, 0.0
        %v494 = vmax.f32 %v448, 0.0
        %v495 = vadd.f32 %v487, %v488
        %v496 = vadd.f32 %v495, %v489
        %v497 = vadd.f32 %v496, %v490
        %v498 = vadd.f32 %v497, %v491
        %v499 = vadd.f32 %v498, %v492
        %v500 = vadd.f32 %v499, %v493
        %v501 = vadd.f32 %v500, %v494
        %v502 = vrot.slane %v501, 4
        %v503 = vadd.f32 %v501, %v502
        %v504 = vrot.slane %v503, 2
        %v505 = vadd.f32 %v503, %v504
        %v506 = vrot.slane %v505, 1
        %v507 = vadd.f32 %v505, %v506
        %v508 = vmul.f32 %v487, %v487
        %v509 = vmul.f32 %v488, %v488
        %v510 = vmul.f32 %v489, %v489
        %v511 = vmul.f32 %v490, %v490
        %v512 = vmul.f32 %v491, %v491
        %v513 = vmul.f32 %v492, %v492
        %v514 = vmul.f32 %v493, %v493
        %v515 = vmul.f32 %v494, %v494
        %v516 = vadd.f32 %v508, %v509
        %v517 = vadd.f32 %v516, %v510
        %v518 = vadd.f32 %v517, %v511
        %v519 = vadd.f32 %v518, %v512
        %v520 = vadd.f32 %v519, %v513
        %v521 = vadd.f32 %v520, %v514
        %v522 = vadd.f32 %v521, %v515
        %v523 = vrot.slane %v522, 4
        %v524 = vadd.f32 %v522, %v523
        %v525 = vrot.slane %v524, 2
        %v526 = vadd.f32 %v524, %v525
        %v527 = vrot.slane %v526, 1
        %v528 = vadd.f32 %v526, %v527
        %v529 = vmul.f32 %v507, 0.015625
        %v530 = vmul.f32 %v528, 0.015625
        %v531 = vmul.f32 %v529, %v529
        %v532 = vsub.f32 %v530, %v531
        %v533 = vmax.f32 %v532, 0.0
        %s534 = sld [smem:[#allocation6 + $0x10]]
        %v535 = vadd.f32 %v533, 1e-05
        %v536 = vrsqrt.pop %v535
        %v537 = vstv %s534
        %v538 = vmul.f32 %v537, %v536
        %s539 = sld [smem:[#allocation6 + $0x12]]
        %v540 = vmul.f32 %v529, %v538
        %v541 = vstv %s539
        %v542 = vsub.f32 %v541, %v540
        %v543 = vmul.f32 %v487, %v538
        %v544 = vmul.f32 %v488, %v538
        %v545 = vmul.f32 %v489, %v538
        %v546 = vmul.f32 %v490, %v538
        %v547 = vmul.f32 %v491, %v538
        %v548 = vmul.f32 %v492, %v538
        %v549 = vmul.f32 %v493, %v538
        %v550 = vmul.f32 %v494, %v538
        %v551 = vadd.f32 %v543, %v542
        %v552 = vadd.f32 %v544, %v542
        %v553 = vadd.f32 %v545, %v542
        %v554 = vadd.f32 %v546, %v542
        %v555 = vadd.f32 %v547, %v542
        %v556 = vadd.f32 %v548, %v542
        %v557 = vadd.f32 %v549, %v542
        %v558 = vadd.f32 %v550, %v542
        %v559 = vmax.f32 %v479, 0.0
        %v560 = vmax.f32 %v480, 0.0
        %v561 = vmax.f32 %v481, 0.0
        %v562 = vmax.f32 %v482, 0.0
        %v563 = vmax.f32 %v483, 0.0
        %v564 = vmax.f32 %v484, 0.0
        %v565 = vmax.f32 %v485, 0.0
        %v566 = vmax.f32 %v486, 0.0
        %v567 = vadd.f32 %v559, %v560
        %v568 = vadd.f32 %v567, %v561
        %v569 = vadd.f32 %v568, %v562
        %v570 = vadd.f32 %v569, %v563
        %v571 = vadd.f32 %v570, %v564
        %v572 = vadd.f32 %v571, %v565
        %v573 = vadd.f32 %v572, %v566
        %v574 = vrot.slane %v573, 4
        %v575 = vadd.f32 %v573, %v574
        %v576 = vrot.slane %v575, 2
        %v577 = vadd.f32 %v575, %v576
        %v578 = vrot.slane %v577, 1
        %v579 = vadd.f32 %v577, %v578
        %v580 = vmul.f32 %v559, %v559
        %v581 = vmul.f32 %v560, %v560
        %v582 = vmul.f32 %v561, %v561
        %v583 = vmul.f32 %v562, %v562
        %v584 = vmul.f32 %v563, %v563
        %v585 = vmul.f32 %v564, %v564
        %v586 = vmul.f32 %v565, %v565
        %v587 = vmul.f32 %v566, %v566
        %v588 = vadd.f32 %v580, %v581
        %v589 = vadd.f32 %v588, %v582
        %v590 = vadd.f32 %v589, %v583
        %v591 = vadd.f32 %v590, %v584
        %v592 = vadd.f32 %v591, %v585
        %v593 = vadd.f32 %v592, %v586
        %v594 = vadd.f32 %v593, %v587
        %v595 = vrot.slane %v594, 4
        %v596 = vadd.f32 %v594, %v595
        %v597 = vrot.slane %v596, 2
        %v598 = vadd.f32 %v596, %v597
        %v599 = vrot.slane %v598, 1
        %v600 = vadd.f32 %v598, %v599
        %v601 = vmul.f32 %v579, 0.015625
        %v602 = vmul.f32 %v600, 0.015625
        %v603 = vmul.f32 %v601, %v601
        %v604 = vsub.f32 %v602, %v603
        %v605 = vmax.f32 %v604, 0.0
        %s606 = sld [smem:[#allocation6 + $0x11]]
        %v607 = vadd.f32 %v605, 1e-05
        %v608 = vrsqrt.pop %v607
        %v609 = vstv %s606
        %v610 = vmul.f32 %v609, %v608
        %s611 = sld [smem:[#allocation6 + $0x13]]
        %v612 = vmul.f32 %v601, %v610
        %v613 = vstv %s611
        %v614 = vsub.f32 %v613, %v612
        %v615 = vmul.f32 %v559, %v610
        %v616 = vmul.f32 %v560, %v610
        %v617 = vmul.f32 %v561, %v610
        %v618 = vmul.f32 %v562, %v610
        %v619 = vmul.f32 %v563, %v610
        %v620 = vmul.f32 %v564, %v610
        %v621 = vmul.f32 %v565, %v610
        %v622 = vmul.f32 %v566, %v610
        %v623 = vadd.f32 %v615, %v614
        %v624 = vadd.f32 %v616, %v614
        %v625 = vadd.f32 %v617, %v614
        %v626 = vadd.f32 %v618, %v614
        %v627 = vadd.f32 %v619, %v614
        %v628 = vadd.f32 %v620, %v614
        %v629 = vadd.f32 %v621, %v614
        %v630 = vadd.f32 %v622, %v614
        %s631 = sld [smem:[#allocation6 + $0x14]]
        %v632 = vstv %s631
        %v633 = vmul.f32 %v551, %v632
        %v634 = vmul.f32 %v552, %v632
        %v635 = vmul.f32 %v553, %v632
        %v636 = vmul.f32 %v554, %v632
        %v637 = vmul.f32 %v555, %v632
        %v638 = vmul.f32 %v556, %v632
        %v639 = vmul.f32 %v557, %v632
        %v640 = vmul.f32 %v558, %v632
        %s641 = sld [smem:[#allocation6 + $0x18]]
        %v642 = vstv %s641
        %v643 = vadd.f32 %v633, %v642
        %v644 = vadd.f32 %v634, %v642
        %v645 = vadd.f32 %v635, %v642
        %v646 = vadd.f32 %v636, %v642
        %v647 = vadd.f32 %v637, %v642
        %v648 = vadd.f32 %v638, %v642
        %v649 = vadd.f32 %v639, %v642
        %v650 = vadd.f32 %v640, %v642
        %s651 = sld [smem:[#allocation6 + $0x16]]
        %v652 = vstv %s651
        %v653 = vmul.f32 %v623, %v652
        %v654 = vmul.f32 %v624, %v652
        %v655 = vmul.f32 %v625, %v652
        %v656 = vmul.f32 %v626, %v652
        %v657 = vmul.f32 %v627, %v652
        %v658 = vmul.f32 %v628, %v652
        %v659 = vmul.f32 %v629, %v652
        %v660 = vmul.f32 %v630, %v652
        %v661 = vadd.f32 %v643, %v653
        %v662 = vadd.f32 %v644, %v654
        %v663 = vadd.f32 %v645, %v655
        %v664 = vadd.f32 %v646, %v656
        %v665 = vadd.f32 %v647, %v657
        %v666 = vadd.f32 %v648, %v658
        %v667 = vadd.f32 %v649, %v659
        %v668 = vadd.f32 %v650, %v660
        %s669 = sld [smem:[#allocation6 + $0x15]]
        %v670 = vstv %s669
        %v671 = vmul.f32 %v551, %v670
        %v672 = vmul.f32 %v552, %v670
        %v673 = vmul.f32 %v553, %v670
        %v674 = vmul.f32 %v554, %v670
        %v675 = vmul.f32 %v555, %v670
        %v676 = vmul.f32 %v556, %v670
        %v677 = vmul.f32 %v557, %v670
        %v678 = vmul.f32 %v558, %v670
        %s679 = sld [smem:[#allocation6 + $0x19]]
        %v680 = vstv %s679
        %v681 = vadd.f32 %v671, %v680
        %v682 = vadd.f32 %v672, %v680
        %v683 = vadd.f32 %v673, %v680
        %v684 = vadd.f32 %v674, %v680
        %v685 = vadd.f32 %v675, %v680
        %v686 = vadd.f32 %v676, %v680
        %v687 = vadd.f32 %v677, %v680
        %v688 = vadd.f32 %v678, %v680
        %s689 = sld [smem:[#allocation6 + $0x17]]
        %v690 = vstv %s689
        %v691 = vmul.f32 %v623, %v690
        %v692 = vmul.f32 %v624, %v690
        %v693 = vmul.f32 %v625, %v690
        %v694 = vmul.f32 %v626, %v690
        %v695 = vmul.f32 %v627, %v690
        %v696 = vmul.f32 %v628, %v690
        %v697 = vmul.f32 %v629, %v690
        %v698 = vmul.f32 %v630, %v690
        %v699 = vadd.f32 %v681, %v691
        %v700 = vadd.f32 %v682, %v692
        %v701 = vadd.f32 %v683, %v693
        %v702 = vadd.f32 %v684, %v694
        %v703 = vadd.f32 %v685, %v695
        %v704 = vadd.f32 %v686, %v696
        %v705 = vadd.f32 %v687, %v697
        %v706 = vadd.f32 %v688, %v698
        %v707 = vmax.f32 %v661, 0.0
        %v708 = vmax.f32 %v662, 0.0
        %v709 = vmax.f32 %v663, 0.0
        %v710 = vmax.f32 %v664, 0.0
        %v711 = vmax.f32 %v665, 0.0
        %v712 = vmax.f32 %v666, 0.0
        %v713 = vmax.f32 %v667, 0.0
        %v714 = vmax.f32 %v668, 0.0
        %v715 = vadd.f32 %v707, %v708
        %v716 = vadd.f32 %v715, %v709
        %v717 = vadd.f32 %v716, %v710
        %v718 = vadd.f32 %v717, %v711
        %v719 = vadd.f32 %v718, %v712
        %v720 = vadd.f32 %v719, %v713
        %v721 = vadd.f32 %v720, %v714
        %v722 = vrot.slane %v721, 4
        %v723 = vadd.f32 %v721, %v722
        %v724 = vrot.slane %v723, 2
        %v725 = vadd.f32 %v723, %v724
        %v726 = vrot.slane %v725, 1
        %v727 = vadd.f32 %v725, %v726
        %v728 = vmul.f32 %v707, %v707
        %v729 = vmul.f32 %v708, %v708
        %v730 = vmul.f32 %v709, %v709
        %v731 = vmul.f32 %v710, %v710
        %v732 = vmul.f32 %v711, %v711
        %v733 = vmul.f32 %v712, %v712
        %v734 = vmul.f32 %v713, %v713
        %v735 = vmul.f32 %v714, %v714
        %v736 = vadd.f32 %v728, %v729
        %v737 = vadd.f32 %v736, %v730
        %v738 = vadd.f32 %v737, %v731
        %v739 = vadd.f32 %v738, %v732
        %v740 = vadd.f32 %v739, %v733
        %v741 = vadd.f32 %v740, %v734
        %v742 = vadd.f32 %v741, %v735
        %v743 = vrot.slane %v742, 4
        %v744 = vadd.f32 %v742, %v743
        %v745 = vrot.slane %v744, 2
        %v746 = vadd.f32 %v744, %v745
        %v747 = vrot.slane %v746, 1
        %v748 = vadd.f32 %v746, %v747
        %v749 = vmul.f32 %v727, 0.015625
        %v750 = vmul.f32 %v748, 0.015625
        %v751 = vmul.f32 %v749, %v749
        %v752 = vsub.f32 %v750, %v751
        %v753 = vmax.f32 %v752, 0.0
        %s754 = sld [smem:[#allocation6 + $0x1a]]
        %v755 = vadd.f32 %v753, 1e-05
        %v756 = vrsqrt.pop %v755
        %v757 = vstv %s754
        %v758 = vmul.f32 %v757, %v756
        %s759 = sld [smem:[#allocation6 + $0x1c]]
        %v760 = vmul.f32 %v749, %v758
        %v761 = vstv %s759
        %v762 = vsub.f32 %v761, %v760
        %v763 = vmul.f32 %v707, %v758
        %v764 = vmul.f32 %v708, %v758
        %v765 = vmul.f32 %v709, %v758
        %v766 = vmul.f32 %v710, %v758
        %v767 = vmul.f32 %v711, %v758
        %v768 = vmul.f32 %v712, %v758
        %v769 = vmul.f32 %v713, %v758
        %v770 = vmul.f32 %v714, %v758
        %v771 = vadd.f32 %v763, %v762
        %v772 = vadd.f32 %v764, %v762
        %v773 = vadd.f32 %v765, %v762
        %v774 = vadd.f32 %v766, %v762
        %v775 = vadd.f32 %v767, %v762
        %v776 = vadd.f32 %v768, %v762
        %v777 = vadd.f32 %v769, %v762
        %v778 = vadd.f32 %v770, %v762
        %v779 = vmax.f32 %v699, 0.0
        %v780 = vmax.f32 %v700, 0.0
        %v781 = vmax.f32 %v701, 0.0
        %v782 = vmax.f32 %v702, 0.0
        %v783 = vmax.f32 %v703, 0.0
        %v784 = vmax.f32 %v704, 0.0
        %v785 = vmax.f32 %v705, 0.0
        %v786 = vmax.f32 %v706, 0.0
        %v787 = vadd.f32 %v779, %v780
        %v788 = vadd.f32 %v787, %v781
        %v789 = vadd.f32 %v788, %v782
        %v790 = vadd.f32 %v789, %v783
        %v791 = vadd.f32 %v790, %v784
        %v792 = vadd.f32 %v791, %v785
        %v793 = vadd.f32 %v792, %v786
        %v794 = vrot.slane %v793, 4
        %v795 = vadd.f32 %v793, %v794
        %v796 = vrot.slane %v795, 2
        %v797 = vadd.f32 %v795, %v796
        %v798 = vrot.slane %v797, 1
        %v799 = vadd.f32 %v797, %v798
        %v800 = vmul.f32 %v779, %v779
        %v801 = vmul.f32 %v780, %v780
        %v802 = vmul.f32 %v781, %v781
        %v803 = vmul.f32 %v782, %v782
        %v804 = vmul.f32 %v783, %v783
        %v805 = vmul.f32 %v784, %v784
        %v806 = vmul.f32 %v785, %v785
        %v807 = vmul.f32 %v786, %v786
        %v808 = vadd.f32 %v800, %v801
        %v809 = vadd.f32 %v808, %v802
        %v810 = vadd.f32 %v809, %v803
        %v811 = vadd.f32 %v810, %v804
        %v812 = vadd.f32 %v811, %v805
        %v813 = vadd.f32 %v812, %v806
        %v814 = vadd.f32 %v813, %v807
        %v815 = vrot.slane %v814, 4
        %v816 = vadd.f32 %v814, %v815
        %v817 = vrot.slane %v816, 2
        %v818 = vadd.f32 %v816, %v817
        %v819 = vrot.slane %v818, 1
        %v820 = vadd.f32 %v818, %v819
        %v821 = vmul.f32 %v799, 0.015625
        %v822 = vmul.f32 %v820, 0.015625
        %v823 = vmul.f32 %v821, %v821
        %v824 = vsub.f32 %v822, %v823
        %v825 = vmax.f32 %v824, 0.0
        %s826 = sld [smem:[#allocation6 + $0x1b]]
        %v827 = vadd.f32 %v825, 1e-05
        %v828 = vrsqrt.pop %v827
        %v829 = vstv %s826
        %v830 = vmul.f32 %v829, %v828
        %s831 = sld [smem:[#allocation6 + $0x1d]]
        %v832 = vmul.f32 %v821, %v830
        %v833 = vstv %s831
        %v834 = vsub.f32 %v833, %v832
        %v835 = vmul.f32 %v779, %v830
        %v836 = vmul.f32 %v780, %v830
        %v837 = vmul.f32 %v781, %v830
        %v838 = vmul.f32 %v782, %v830
        %v839 = vmul.f32 %v783, %v830
        %v840 = vmul.f32 %v784, %v830
        %v841 = vmul.f32 %v785, %v830
        %v842 = vmul.f32 %v786, %v830
        %v843 = vadd.f32 %v835, %v834
        %v844 = vadd.f32 %v836, %v834
        %v845 = vadd.f32 %v837, %v834
        %v846 = vadd.f32 %v838, %v834
        %v847 = vadd.f32 %v839, %v834
        %v848 = vadd.f32 %v840, %v834
        %v849 = vadd.f32 %v841, %v834
        %v850 = vadd.f32 %v842, %v834
        %s851 = sld [smem:[#allocation6 + $0x1e]]
        %v852 = vstv %s851
        %v853 = vmul.f32 %v771, %v852
        %v854 = vmul.f32 %v772, %v852
        %v855 = vmul.f32 %v773, %v852
        %v856 = vmul.f32 %v774, %v852
        %v857 = vmul.f32 %v775, %v852
        %v858 = vmul.f32 %v776, %v852
        %v859 = vmul.f32 %v777, %v852
        %v860 = vmul.f32 %v778, %v852
        %s861 = sld [smem:[#allocation6 + $0x24]]
        %v862 = vstv %s861
        %v863 = vadd.f32 %v853, %v862
        %v864 = vadd.f32 %v854, %v862
        %v865 = vadd.f32 %v855, %v862
        %v866 = vadd.f32 %v856, %v862
        %v867 = vadd.f32 %v857, %v862
        %v868 = vadd.f32 %v858, %v862
        %v869 = vadd.f32 %v859, %v862
        %v870 = vadd.f32 %v860, %v862
        %s871 = sld [smem:[#allocation6 + $0x21]]
        %v872 = vstv %s871
        %v873 = vmul.f32 %v843, %v872
        %v874 = vmul.f32 %v844, %v872
        %v875 = vmul.f32 %v845, %v872
        %v876 = vmul.f32 %v846, %v872
        %v877 = vmul.f32 %v847, %v872
        %v878 = vmul.f32 %v848, %v872
        %v879 = vmul.f32 %v849, %v872
        %v880 = vmul.f32 %v850, %v872
        %v881 = vadd.f32 %v863, %v873
        %v882 = vadd.f32 %v864, %v874
        %v883 = vadd.f32 %v865, %v875
        %v884 = vadd.f32 %v866, %v876
        %v885 = vadd.f32 %v867, %v877
        %v886 = vadd.f32 %v868, %v878
        %v887 = vadd.f32 %v869, %v879
        %v888 = vadd.f32 %v870, %v880
        %s889 = sld [smem:[#allocation6 + $0x1f]]
        %v890 = vstv %s889
        %v891 = vmul.f32 %v771, %v890
        %v892 = vmul.f32 %v772, %v890
        %v893 = vmul.f32 %v773, %v890
        %v894 = vmul.f32 %v774, %v890
        %v895 = vmul.f32 %v775, %v890
        %v896 = vmul.f32 %v776, %v890
        %v897 = vmul.f32 %v777, %v890
        %v898 = vmul.f32 %v778, %v890
        %s899 = sld [smem:[#allocation6 + $0x25]]
        %v900 = vstv %s899
        %v901 = vadd.f32 %v891, %v900
        %v902 = vadd.f32 %v892, %v900
        %v903 = vadd.f32 %v893, %v900
        %v904 = vadd.f32 %v894, %v900
        %v905 = vadd.f32 %v895, %v900
        %v906 = vadd.f32 %v896, %v900
        %v907 = vadd.f32 %v897, %v900
        %v908 = vadd.f32 %v898, %v900
        %s909 = sld [smem:[#allocation6 + $0x22]]
        %v910 = vstv %s909
        %v911 = vmul.f32 %v843, %v910
        %v912 = vmul.f32 %v844, %v910
        %v913 = vmul.f32 %v845, %v910
        %v914 = vmul.f32 %v846, %v910
        %v915 = vmul.f32 %v847, %v910
        %v916 = vmul.f32 %v848, %v910
        %v917 = vmul.f32 %v849, %v910
        %v918 = vmul.f32 %v850, %v910
        %v919 = vadd.f32 %v901, %v911
        %v920 = vadd.f32 %v902, %v912
        %v921 = vadd.f32 %v903, %v913
        %v922 = vadd.f32 %v904, %v914
        %v923 = vadd.f32 %v905, %v915
        %v924 = vadd.f32 %v906, %v916
        %v925 = vadd.f32 %v907, %v917
        %v926 = vadd.f32 %v908, %v918
        %s927 = sld [smem:[#allocation6 + $0x20]]
        %v928 = vstv %s927
        %v929 = vmul.f32 %v771, %v928
        %v930 = vmul.f32 %v772, %v928
        %v931 = vmul.f32 %v773, %v928
        %v932 = vmul.f32 %v774, %v928
        %v933 = vmul.f32 %v775, %v928
        %v934 = vmul.f32 %v776, %v928
        %v935 = vmul.f32 %v777, %v928
        %v936 = vmul.f32 %v778, %v928
        %s937 = sld [smem:[#allocation6 + $0x26]]
        %v938 = vstv %s937
        %v939 = vadd.f32 %v929, %v938
        %v940 = vadd.f32 %v930, %v938
        %v941 = vadd.f32 %v931, %v938
        %v942 = vadd.f32 %v932, %v938
        %v943 = vadd.f32 %v933, %v938
        %v944 = vadd.f32 %v934, %v938
        %v945 = vadd.f32 %v935, %v938
        %v946 = vadd.f32 %v936, %v938
        %s947 = sld [smem:[#allocation6 + $0x23]]
        %v948 = vstv %s947
        %v949 = vmul.f32 %v843, %v948
        %v950 = vmul.f32 %v844, %v948
        %v951 = vmul.f32 %v845, %v948
        %v952 = vmul.f32 %v846, %v948
        %v953 = vmul.f32 %v847, %v948
        %v954 = vmul.f32 %v848, %v948
        %v955 = vmul.f32 %v849, %v948
        %v956 = vmul.f32 %v850, %v948
        %v957 = vadd.f32 %v939, %v949
        %v958 = vadd.f32 %v940, %v950
        %v959 = vadd.f32 %v941, %v951
        %v960 = vadd.f32 %v942, %v952
        %v961 = vadd.f32 %v943, %v953
        %v962 = vadd.f32 %v944, %v954
        %v963 = vadd.f32 %v945, %v955
        %v964 = vadd.f32 %v946, %v956
        %v965 = vmax.f32 %v881, %v919
        %v966 = vmax.f32 %v882, %v920
        %v967 = vmax.f32 %v883, %v921
        %v968 = vmax.f32 %v884, %v922
        %v969 = vmax.f32 %v885, %v923
        %v970 = vmax.f32 %v886, %v924
        %v971 = vmax.f32 %v887, %v925
        %v972 = vmax.f32 %v888, %v926
        %v973 = vmax.f32 %v965, %v957
        %v974 = vmax.f32 %v966, %v958
        %v975 = vmax.f32 %v967, %v959
        %v976 = vmax.f32 %v968, %v960
        %v977 = vmax.f32 %v969, %v961
        %v978 = vmax.f32 %v970, %v962
        %v979 = vmax.f32 %v971, %v963
        %v980 = vmax.f32 %v972, %v964
        %v981 = vsub.f32 %v881, %v973
        %v982 = vsub.f32 %v882, %v974
        %v983 = vsub.f32 %v883, %v975
        %v984 = vsub.f32 %v884, %v976
        %v985 = vsub.f32 %v885, %v977
        %v986 = vsub.f32 %v886, %v978
        %v987 = vsub.f32 %v887, %v979
        %v988 = vsub.f32 %v888, %v980
        %v989 = vmul.f32 %v981, 1.442695
        %v990 = vpow.pop %v989
        %v991 = vmul.f32 %v982, 1.442695
        %v992 = vpow.pop %v991
        %v993 = vmul.f32 %v983, 1.442695
        %v994 = vpow.pop %v993
        %v995 = vmul.f32 %v984, 1.442695
        %v996 = vpow.pop %v995
        %v997 = vmul.f32 %v985, 1.442695
        %v998 = vpow.pop %v997
        %v999 = vmul.f32 %v986, 1.442695
        %v1000 = vpow.pop %v999
        %v1001 = vmul.f32 %v987, 1.442695
        %v1002 = vpow.pop %v1001
        %v1003 = vmul.f32 %v988, 1.442695
        %v1004 = vpow.pop %v1003
        %v1005 = vsub.f32 %v919, %v973
        %v1006 = vsub.f32 %v920, %v974
        %v1007 = vsub.f32 %v921, %v975
        %v1008 = vsub.f32 %v922, %v976
        %v1009 = vsub.f32 %v923, %v977
        %v1010 = vsub.f32 %v924, %v978
        %v1011 = vsub.f32 %v925, %v979
        %v1012 = vsub.f32 %v926, %v980
        %v1013 = vmul.f32 %v1005, 1.442695
        %v1014 = vpow.pop %v1013
        %v1015 = vmul.f32 %v1006, 1.442695
        %v1016 = vpow.pop %v1015
        %v1017 = vmul.f32 %v1007, 1.442695
        %v1018 = vpow.pop %v1017
        %v1019 = vmul.f32 %v1008, 1.442695
        %v1020 = vpow.pop %v1019
        %v1021 = vmul.f32 %v1009, 1.442695
        %v1022 = vpow.pop %v1021
        %v1023 = vmul.f32 %v1010, 1.442695
        %v1024 = vpow.pop %v1023
        %v1025 = vmul.f32 %v1011, 1.442695
        %v1026 = vpow.pop %v1025
        %v1027 = vmul.f32 %v1012, 1.442695
        %v1028 = vpow.pop %v1027
        %v1029 = vsub.f32 %v957, %v973
        %v1030 = vsub.f32 %v958, %v974
        %v1031 = vsub.f32 %v959, %v975
        %v1032 = vsub.f32 %v960, %v976
        %v1033 = vsub.f32 %v961, %v977
        %v1034 = vsub.f32 %v962, %v978
        %v1035 = vsub.f32 %v963, %v979
        %v1036 = vsub.f32 %v964, %v980
        %v1037 = vmul.f32 %v1029, 1.442695
        %v1038 = vpow.pop %v1037
        %v1039 = vmul.f32 %v1030, 1.442695
        %v1040 = vpow.pop %v1039
        %v1041 = vmul.f32 %v1031, 1.442695
        %v1042 = vpow.pop %v1041
        %v1043 = vmul.f32 %v1032, 1.442695
        %v1044 = vpow.pop %v1043
        %v1045 = vmul.f32 %v1033, 1.442695
        %v1046 = vpow.pop %v1045
        %v1047 = vmul.f32 %v1034, 1.442695
        %v1048 = vpow.pop %v1047
        %v1049 = vmul.f32 %v1035, 1.442695
        %v1050 = vpow.pop %v1049
        %v1051 = vmul.f32 %v1036, 1.442695
        %v1052 = vpow.pop %v1051
        %v1053 = vadd.f32 %v990, %v1014
        %v1054 = vadd.f32 %v992, %v1016
        %v1055 = vadd.f32 %v994, %v1018
        %v1056 = vadd.f32 %v996, %v1020
        %v1057 = vadd.f32 %v998, %v1022
        %v1058 = vadd.f32 %v1000, %v1024
        %v1059 = vadd.f32 %v1002, %v1026
        %v1060 = vadd.f32 %v1004, %v1028
        %v1061 = vadd.f32 %v1053, %v1038
        %v1062 = vadd.f32 %v1054, %v1040
        %v1063 = vadd.f32 %v1055, %v1042
        %v1064 = vadd.f32 %v1056, %v1044
        %v1065 = vadd.f32 %v1057, %v1046
        %v1066 = vadd.f32 %v1058, %v1048
        %v1067 = vadd.f32 %v1059, %v1050
        %v1068 = vadd.f32 %v1060, %v1052
        %v1069 = vrcp.pop %v1061
        %v1070 = vmul.f32 1.0, %v1069
        %v1071 = vrcp.pop %v1062
        %v1072 = vmul.f32 1.0, %v1071
        %v1073 = vrcp.pop %v1063
        %v1074 = vmul.f32 1.0, %v1073
        %v1075 = vrcp.pop %v1064
        %v1076 = vmul.f32 1.0, %v1075
        %v1077 = vrcp.pop %v1065
        %v1078 = vmul.f32 1.0, %v1077
        %v1079 = vrcp.pop %v1066
        %v1080 = vmul.f32 1.0, %v1079
        %v1081 = vrcp.pop %v1067
        %v1082 = vmul.f32 1.0, %v1081
        %v1083 = vrcp.pop %v1068
        %v1084 = vmul.f32 1.0, %v1083
        %v1085 = vmul.f32 %v990, %v1070
        %v1086 = vmul.f32 %v992, %v1072
        %v1087 = vmul.f32 %v994, %v1074
        %v1088 = vmul.f32 %v996, %v1076
        %v1089 = vmul.f32 %v998, %v1078
        %v1090 = vmul.f32 %v1000, %v1080
        %v1091 = vmul.f32 %v1002, %v1082
        %v1092 = vmul.f32 %v1004, %v1084
        %1093 = vst [vmem:[%s174] sm:$0xff] %v1085
        %1094 = vst [vmem:[%s174 + $0x8] sm:$0xff] %v1086
        %1095 = vst [vmem:[%s174 + $0x10] sm:$0xff] %v1087
        %1096 = vst [vmem:[%s174 + $0x18] sm:$0xff] %v1088
        %1097 = vst [vmem:[%s174 + $0x20] sm:$0xff] %v1089
        %1098 = vst [vmem:[%s174 + $0x28] sm:$0xff] %v1090
        %1099 = vst [vmem:[%s174 + $0x30] sm:$0xff] %v1091
        %1100 = vst [vmem:[%s174 + $0x38] sm:$0xff] %v1092
        %v1101 = vmul.f32 %v1014, %v1070
        %v1102 = vmul.f32 %v1016, %v1072
        %v1103 = vmul.f32 %v1018, %v1074
        %v1104 = vmul.f32 %v1020, %v1076
        %v1105 = vmul.f32 %v1022, %v1078
        %v1106 = vmul.f32 %v1024, %v1080
        %v1107 = vmul.f32 %v1026, %v1082
        %v1108 = vmul.f32 %v1028, %v1084
        %s1109 = scalar_lea.vmem %s174, 64 [#allocation7]
        %1110 = vst [vmem:[%s1109] sm:$0xff] %v1101
        %1111 = vst [vmem:[%s1109 + $0x8] sm:$0xff] %v1102
        %1112 = vst [vmem:[%s1109 + $0x10] sm:$0xff] %v1103
        %1113 = vst [vmem:[%s1109 + $0x18] sm:$0xff] %v1104
        %1114 = vst [vmem:[%s1109 + $0x20] sm:$0xff] %v1105
        %1115 = vst [vmem:[%s1109 + $0x28] sm:$0xff] %v1106
        %1116 = vst [vmem:[%s1109 + $0x30] sm:$0xff] %v1107
        %1117 = vst [vmem:[%s1109 + $0x38] sm:$0xff] %v1108
        %v1118 = vmul.f32 %v1038, %v1070
        %v1119 = vmul.f32 %v1040, %v1072
        %v1120 = vmul.f32 %v1042, %v1074
        %v1121 = vmul.f32 %v1044, %v1076
        %v1122 = vmul.f32 %v1046, %v1078
        %v1123 = vmul.f32 %v1048, %v1080
        %v1124 = vmul.f32 %v1050, %v1082
        %v1125 = vmul.f32 %v1052, %v1084
        %s1126 = scalar_lea.vmem %s174, 128 [#allocation7]
        %1127 = vst [vmem:[%s1126] sm:$0xff] %v1118
        %1128 = vst [vmem:[%s1126 + $0x8] sm:$0xff] %v1119
        %1129 = vst [vmem:[%s1126 + $0x10] sm:$0xff] %v1120
        %1130 = vst [vmem:[%s1126 + $0x18] sm:$0xff] %v1121
        %1131 = vst [vmem:[%s1126 + $0x20] sm:$0xff] %v1122
        %1132 = vst [vmem:[%s1126 + $0x28] sm:$0xff] %v1123
        %1133 = vst [vmem:[%s1126 + $0x30] sm:$0xff] %v1124
        %1134 = vst [vmem:[%s1126 + $0x38] sm:$0xff] %v1125
        %s1135 = sand.u32 %s75, 1
        %s1136 = scalar_lea.sflag [#allocation4], %s1135
        %s1137 = sand.u32 %s75, 1
        %s1138 = smul.addr %s1137, 192
        %s1139 = scalar_lea.vmem [#allocation7], %s1138
        // Predicated region
        $region37: #{forward_fm.1} parent=27 // pred_check
          %p1140 = pneg %p85
        $region38: #{forward_fm.1} parent=27 // pred_check_branch
          %1142 = sbr.rel (%p1140) target = $region40
        $region39: #{forward_fm.1} parent=27 // pred_region
          %s1144 = ssub.s32 3072, 3072
          %1145 = vsyncadd %s1136, %s1144
          %s1146 = smul.addr %s20, 128
          %s1147 = scalar_lea.hbm %s2, %s1146
          %s1148 = sshll.u32 %s1139, 4
          %s1149 = int_to_ptr.vmem [resolvable:$true] %s1148
          %1154 = dma.vmem_to_hbm [thread:$0]  %s1149, 3072, %s1147, %s1136, 128, 256, 8
        $region40: #{forward_fm.1} parent=27 // pred_fallthru
          _
      $region28: #{forward_fm.1} parent=5 // pred_fallthru
        _
      %p1155 = scmp.le.s32.totalorder 2, %s15
      // Predicated region
      $region41: #{forward_fm.1} parent=5 // pred_check
        %p1156 = pneg %p1155
      $region42: #{forward_fm.1} parent=5 // pred_check_branch
        %1158 = sbr.rel (%p1156) target = $region44
      $region43: #{forward_fm.1} parent=5 // pred_region
        %s1159 = ssub.s32 %s15, 2
        // Predicated region
        $region45: #{forward_fm.1} parent=43 // pred_check
          %p1160 = pneg %p91
        $region46: #{forward_fm.1} parent=43 // pred_check_branch
          %1162 = sbr.rel (%p1160) target = $region48
        $region47: #{forward_fm.1} parent=43 // pred_region
          %s1163 = sand.u32 %s76, 1
          %s1164 = scalar_lea.sflag [#allocation4], %s1163
          %s1165 = sand.u32 %s76, 1
          %s1166 = smul.addr %s1165, 192
          %s1167 = scalar_lea.vmem [#allocation7], %s1166
          %1168 = dma.done %s1164, 3072
        $region48: #{forward_fm.1} parent=43 // pred_fallthru
          _
      $region44: #{forward_fm.1} parent=5 // pred_fallthru
        _
    $region6: #{forward_fm.1} parent=1 // loop_footer
      %s19 = sadd.s32 1, %s15
    $region7: #{forward_fm.1} parent=1 // loop_footer_branch
      %14 = sbr.rel target = $region3
    $region8: #{forward_fm.1} parent=1 // loop_exit
      _
    %1169 = vsyncpa [#allocation3], 1
    %s1170 = scalar_lea.sflag [#allocation3], 1
    %1171 = vsyncpa %s1170, 1
    %1172 = vsyncpa [#allocation4], 1
    %s1173 = scalar_lea.sflag [#allocation4], 1
    %1174 = vsyncpa %s1173, 1
    %1175 = vsyncpa [#allocation5], 1
    %s1176 = scalar_lea.sflag [#allocation5], 1
    %1177 = vsyncpa %s1176, 1

</llo_original>
